<compile_context>
chip_gen: v7x
topology: tpu7x:2x2x1
jax: 0.10.0
libtpu: 0.0.40
codegen_flags: <defaults>
</compile_context>

<pallas_src>
import functools

import numpy as np

import jax
import jax.numpy as jnp
from jax.experimental import pallas as pl
from jax.experimental.pallas import tpu as pltpu


def _relu6(x):
    return jnp.minimum(jnp.maximum(x, 0.0), 6.0)


def _round_up(x, m):
    return (x + m - 1) // m * m


def _choose_row_tile(Ho, W, Wo, cp_in, cp_exp, cp_out, s,
                     budget_bytes=10 * 1024 * 1024, max_rows=64):
    """Largest output-row tile (multiple of 8, capped) whose per-step working
    set fits `budget_bytes`.  The budget is small enough that double-buffered
    tiles also fit v7x's 64 MiB physical VMEM with plenty of headroom; lower
    budget/max_rows further for very wide Cexp on v7x."""
    cap = max(8, min(max_rows, _round_up(Ho, 8)))
    for th in range(cap, 7, -8):
        th_in = s * (th - 1) + 3
        est = (2 * th_in * W * cp_in * 4            # input tile (double buffered)
               + 2 * th * Wo * cp_out * 4           # output tile (double buffered)
               + 2 * th_in * (W + 2) * cp_exp * 4   # expanded acts + shifted taps
               + 3 * th * Wo * cp_exp * 4           # dw accumulator + pointwise in/out
               + 4 * (cp_in + 2 * cp_exp + cp_out) * cp_exp)   # bf16 weights x2 bufs
        if est <= budget_bytes:
            return max(1, min(th, Ho))
    return max(1, min(8, Ho))


def _irb_kernel(x_ref, w_exp_ref, w_dw_ref, w_pw_ref, dw_sh_ref,
                w_lin_ref, lin_sh_ref, o_ref, *,
                residual, row_starts, base_plan, col_offsets):
    th_in, w_in, cp_in = x_ref.shape           # input row tile (with 1-row halo)
    th, wo, cp_out = o_ref.shape               # output row tile
    cp_exp = w_pw_ref.shape[1]
    mxu_dtype = w_exp_ref.dtype

    x = x_ref[...]                             # (th_in, w_in, cp_in) f32

    # ---- expansion 1x1 conv: BN scale folded into the weights, BN shift folded
    #      into the matmul via the constant-1 channel (which is 0 on halo/pad
    #      rows, so those rows come out exactly 0 for the depthwise padding).
    x2d = x.reshape(th_in * w_in, cp_in).astype(mxu_dtype)
    y = jnp.dot(x2d, w_exp_ref[...], preferred_element_type=jnp.float32)
    y = _relu6(y).reshape(th_in, w_in, cp_exp)

    # ---- depthwise 3x3, stride s: taps stay value-resident.  `base` is y with
    #      the zero columns required by the conv padding; every tap read below
    #      is a contiguous static slice (stride-2 is handled by the row/column
    #      parity grouping done in the wrapper, no strided sublane access).
    pieces = []
    for p in base_plan:
        if p[0] == "z":
            pieces.append(jnp.zeros((th_in, p[1], cp_exp), jnp.float32))
        else:
            pieces.append(y[:, p[1]:p[1] + p[2], :])
    base = pieces[0] if len(pieces) == 1 else jnp.concatenate(pieces, axis=1)
    col_taps = [base[:, o:o + wo, :] for o in col_offsets]

    w_dw = w_dw_ref[...]                       # (9, cp_exp) f32, one row per tap
    acc = jnp.zeros((th, wo, cp_exp), jnp.float32)
    for di in range(3):
        r0 = row_starts[di]
        for dj in range(3):
            k = 3 * di + dj
            acc = acc + col_taps[dj][r0:r0 + th] * w_dw[k:k + 1, :]

    # ---- pointwise 1x1 conv + folded BN + ReLU6
    acc2d = acc.reshape(th * wo, cp_exp).astype(mxu_dtype)
    y2 = jnp.dot(acc2d, w_pw_ref[...], preferred_element_type=jnp.float32)
    y2 = _relu6(y2 + dw_sh_ref[...])

    # ---- linear 1x1 conv + folded BN (no activation)
    y3 = jnp.dot(y2.astype(mxu_dtype), w_lin_ref[...],
                 preferred_element_type=jnp.float32)
    y3 = y3 + lin_sh_ref[...]

    if residual:   # static (trace-time) decision, like the torch module
        x_res = x[1:th + 1].reshape(th * w_in, cp_in)[:, :cp_out]   # w_in == wo here
        y3 = y3 + x_res

    o_ref[...] = y3.reshape(th, wo, cp_out)    # lane-dense (cp_out % 128 == 0) store


def irb_forward(x_nchw, params, s, *, tile_rows=None, matmul_dtype=jnp.bfloat16):
    if s not in (1, 2):
        # TODO(synk): strides other than 1/2 (unused by MobileNetV2-style IRBs).
        raise NotImplementedError("irb_forward supports stride 1 and 2 only")

    N, Cin, H, W = x_nchw.shape
    Cexp = params["w_exp"].shape[1]
    Cout = params["w_lin"].shape[1]
    Ho = (H + 2 - 3) // s + 1
    Wo = (W + 2 - 3) // s + 1
    residual = (s == 1 and Cin == Cout)

    # Lane-dense channel padding (multiples of 128). +1 input channel is the
    # constant-1 "bias plane" carrying the folded expansion-BN shift.
    cp_in = _round_up(Cin + 1, 128)
    cp_exp = _round_up(Cexp, 128)
    cp_out = _round_up(Cout, 128)

    th = tile_rows if tile_rows is not None else _choose_row_tile(
        Ho, W, Wo, cp_in, cp_exp, cp_out, s)
    th = max(1, min(th, Ho))
    n_tiles = -(-Ho // th)
    ho_pad = n_tiles * th

    # ---- input prep: NCHW -> NHWC, channel pad + ones plane, 1-row zero halo,
    #      per-tile overlapping row gather (halo duplicated host-side so the
    #      kernel sees simple blocked tiles); stride-2 rows/cols grouped by
    #      parity so the kernel only takes contiguous slices.
    x = jnp.transpose(x_nchw, (0, 2, 3, 1)).astype(jnp.float32)
    xp = jnp.zeros((N, H, W, cp_in), jnp.float32)
    xp = xp.at[..., :Cin].set(x).at[..., Cin].set(1.0)
    xp = jnp.pad(xp, ((0, 0), (1, 1), (0, 0), (0, 0)))          # zero halo rows
    if s == 2:
        col_perm = np.concatenate([np.arange(0, W, 2), np.arange(1, W, 2)])
        xp = xp[:, :, col_perm, :]                              # [even cols | odd cols]
        offs = np.concatenate([np.arange(0, 2 * th + 1, 2), np.arange(1, 2 * th, 2)])
        row_starts = (0, th + 1, 1)
        n_even, n_odd = Wo, W // 2
        plan = [("y", 0, n_even), ("z", 1), ("y", n_even, n_odd)]
        if Wo > n_odd:                      # odd W: last odd tap column is OOB -> zero
            plan.append(("z", Wo - n_odd))
        base_plan = tuple(plan)
        col_offsets = (n_even, 0, n_even + 1)
    else:
        offs = np.arange(th + 2)
        row_starts = (0, 1, 2)
        base_plan = (("z", 1), ("y", 0, W), ("z", 1))
        col_offsets = (0, 1, 2)
    th_in = int(offs.size)
    rows = np.clip(s * th * np.arange(n_tiles)[:, None] + offs[None, :], 0, H + 1)
    x_tiles = xp[:, jnp.asarray(rows)]          # (N, n_tiles, th_in, W, cp_in)

    # ---- parameter prep: fold BN scales into the 1x1 weights, pad channels,
    #      bf16 MXU operands (f32 accumulate), depthwise weights stay f32.
    w_exp = jnp.zeros((cp_in, cp_exp), jnp.float32)
    w_exp = w_exp.at[:Cin, :Cexp].set(params["w_exp"] * params["exp_scale"])
    w_exp = w_exp.at[Cin, :Cexp].set(params["exp_shift"][0])
    w_exp = w_exp.astype(matmul_dtype)

    w_dw = jnp.zeros((9, cp_exp), jnp.float32)
    w_dw = w_dw.at[:, :Cexp].set(params["w_dw"].reshape(9, Cexp))

    w_pw = jnp.zeros((cp_exp, cp_exp), jnp.float32)
    w_pw = w_pw.at[:Cexp, :Cexp].set(params["w_pw"] * params["dw_scale"])
    w_pw = w_pw.astype(matmul_dtype)
    dw_sh = jnp.zeros((1, cp_exp), jnp.float32).at[:, :Cexp].set(params["dw_shift"])

    w_lin = jnp.zeros((cp_exp, cp_out), jnp.float32)
    w_lin = w_lin.at[:Cexp, :Cout].set(params["w_lin"] * params["lin_scale"])
    w_lin = w_lin.astype(matmul_dtype)
    lin_sh = jnp.zeros((1, cp_out), jnp.float32).at[:, :Cout].set(params["lin_shift"])

    kernel = functools.partial(
        _irb_kernel, residual=residual, row_starts=row_starts,
        base_plan=base_plan, col_offsets=col_offsets)

    out = pl.pallas_call(
        kernel,
        out_shape=jax.ShapeDtypeStruct((N, ho_pad, Wo, cp_out), jnp.float32),
        grid_spec=pltpu.PrefetchScalarGridSpec(
            num_scalar_prefetch=0,
            grid=(N, n_tiles),
            in_specs=[
                pl.BlockSpec((None, None, th_in, W, cp_in),
                             lambda n, t: (n, t, 0, 0, 0)),
                # Constant-index weight/shift blocks: the pipeliner does not
                # re-fetch a block whose index is unchanged; they are tiny, so
                # the default double-buffering is left in place.
                pl.BlockSpec((cp_in, cp_exp), lambda n, t: (0, 0)),
                pl.BlockSpec((9, cp_exp), lambda n, t: (0, 0)),
                pl.BlockSpec((cp_exp, cp_exp), lambda n, t: (0, 0)),
                pl.BlockSpec((1, cp_exp), lambda n, t: (0, 0)),
                pl.BlockSpec((cp_exp, cp_out), lambda n, t: (0, 0)),
                pl.BlockSpec((1, cp_out), lambda n, t: (0, 0)),
            ],
            out_specs=pl.BlockSpec((None, th, Wo, cp_out),
                                   lambda n, t: (n, t, 0, 0)),
        ),
        compiler_params=pltpu.CompilerParams(
            # Both grid axes are independent -> megacore / v7x 2-TC sharding.
            dimension_semantics=("parallel", "parallel"),
            # Explicit scoped-VMEM limit with headroom; works on v5e/v6e (128 MiB
            # physical) and v7x (64 MiB physical) given the budgeted row tile.
            vmem_limit_bytes=48 * 1024 * 1024,
        ),
    )(x_tiles, w_exp, w_dw, w_pw, dw_sh, w_lin, lin_sh)

    out = out[:, :Ho, :, :Cout]                 # drop row / channel padding
    return jnp.transpose(out, (0, 3, 1, 2))     # back to NCHW


def init_params(key, in_channels, out_channels, t, eps=1e-5):
    Cexp = in_channels * t
    ks = jax.random.split(key, 16)

    def bn(kg, kb, km, kv, c):
        gamma = jax.random.uniform(kg, (1, c), jnp.float32, 0.5, 1.5)
        beta = jax.random.normal(kb, (1, c), jnp.float32) * 0.1
        mean = jax.random.normal(km, (1, c), jnp.float32) * 0.1
        var = jax.random.uniform(kv, (1, c), jnp.float32, 0.5, 1.5)
        scale = gamma / jnp.sqrt(var + eps)
        shift = beta - mean * scale
        return scale, shift

    w_exp = jax.random.normal(ks[0], (in_channels, Cexp), jnp.float32) * 0.3
    exp_scale, exp_shift = bn(ks[1], ks[2], ks[3], ks[4], Cexp)
    w_dw = jax.random.normal(ks[5], (3, 3, Cexp), jnp.float32) * 0.3
    w_pw = jax.random.normal(ks[6], (Cexp, Cexp), jnp.float32) * 0.3
    dw_scale, dw_shift = bn(ks[7], ks[8], ks[9], ks[10], Cexp)
    w_lin = jax.random.normal(ks[11], (Cexp, out_channels), jnp.float32) * 0.3
    lin_scale, lin_shift = bn(ks[12], ks[13], ks[14], ks[15], out_channels)
    return dict(w_exp=w_exp, exp_scale=exp_scale, exp_shift=exp_shift,
                w_dw=w_dw, w_pw=w_pw, dw_scale=dw_scale, dw_shift=dw_shift,
                w_lin=w_lin, lin_scale=lin_scale, lin_shift=lin_shift)


def irb_reference(x_nchw, p, s):
    """Pure-JAX reference (lax.conv, f32) with identical folded-BN semantics."""
    x = jnp.transpose(x_nchw, (0, 2, 3, 1))
    Cin = x.shape[-1]
    Cexp = p["w_exp"].shape[1]
    Cout = p["w_lin"].shape[1]
    dn = ("NHWC", "HWIO", "NHWC")
    y = jax.lax.conv_general_dilated(x, p["w_exp"].reshape(1, 1, Cin, Cexp),
                                     (1, 1), "VALID", dimension_numbers=dn)
    y = _relu6(y * p["exp_scale"] + p["exp_shift"])
    y = jax.lax.conv_general_dilated(y, p["w_dw"].reshape(3, 3, 1, Cexp),
                                     (s, s), ((1, 1), (1, 1)),
                                     dimension_numbers=dn,
                                     feature_group_count=Cexp)
    y = jax.lax.conv_general_dilated(y, p["w_pw"].reshape(1, 1, Cexp, Cexp),
                                     (1, 1), "VALID", dimension_numbers=dn)
    y = _relu6(y * p["dw_scale"] + p["dw_shift"])
    y = jax.lax.conv_general_dilated(y, p["w_lin"].reshape(1, 1, Cexp, Cout),
                                     (1, 1), "VALID", dimension_numbers=dn)
    y = y * p["lin_scale"] + p["lin_shift"]
    if s == 1 and Cin == Cout:
        y = y + x
    return jnp.transpose(y, (0, 3, 1, 2))


def _check(name, out, ref, rel_tol=3e-2, abs_tol=2e-1):
    # bf16 MXU operands (f32 accumulate) -> looser tolerance than pure f32.
    max_abs = float(jnp.max(jnp.abs(out - ref)))
    rel_l2 = float(jnp.linalg.norm(out - ref) / (jnp.linalg.norm(ref) + 1e-12))
    if not (max_abs < abs_tol and rel_l2 < rel_tol):
        raise AssertionError(
            f"{name}: kernel/reference mismatch: max_abs={max_abs:.4f} "
            f"rel_l2={rel_l2:.4f}")


if __name__ == "__main__":
    key = jax.random.PRNGKey(0)
    k_x, k_p, k_x2, k_p2 = jax.random.split(key, 4)

    # --- stride 1: residual branch exercised; tile_rows=8 -> grid (2, 2) so the
    #     H-tiling / halo path is actually used.
    N, Cin, H, W = 2, 4, 16, 16
    t, s, Cout = 4, 1, 4
    x = jax.random.normal(k_x, (N, Cin, H, W), jnp.float32)
    params = init_params(k_p, Cin, Cout, t)
    out = jax.block_until_ready(irb_forward(x, params, s, tile_rows=8))
    ref = irb_reference(x, params, s)
    assert out.shape == ref.shape == (N, Cout, H, W)
    _check("s=1", out, ref)

    # --- stride 2: no residual; exercises the parity-grouped stride path.
    s2, Cout2 = 2, 8
    x2 = jax.random.normal(k_x2, (N, Cin, H, W), jnp.float32)
    params2 = init_params(k_p2, Cin, Cout2, t)
    out2 = jax.block_until_ready(irb_forward(x2, params2, s2, tile_rows=4))
    ref2 = irb_reference(x2, params2, s2)
    assert out2.shape == ref2.shape == (N, Cout2, H // 2, W // 2)
    _check("s=2", out2, ref2)

    print("KERNEL_OK")
</pallas_src>

<mosaic_0001>
module attributes {stable_mosaic.version = 11 : i64} {
  func.func @_irb_kernel(%arg0: i32, %arg1: i32, %arg2: memref<1x1x10x16x128xf32, #tpu.memory_space<vmem>>, %arg3: memref<128x128xbf16, #tpu.memory_space<vmem>>, %arg4: memref<9x128xf32, #tpu.memory_space<vmem>>, %arg5: memref<128x128xbf16, #tpu.memory_space<vmem>>, %arg6: memref<1x128xf32, #tpu.memory_space<vmem>>, %arg7: memref<128x128xbf16, #tpu.memory_space<vmem>>, %arg8: memref<1x128xf32, #tpu.memory_space<vmem>>, %arg9: memref<1x8x16x128xf32, #tpu.memory_space<vmem>>) attributes {dimension_semantics = [#tpu.dimension_semantics<parallel>, #tpu.dimension_semantics<parallel>], iteration_bounds = array<i64: 2, 2>, scalar_prefetch = 0 : i64, scratch_operands = 0 : i64, tpu.core_type = #tpu.core_type<tc>, window_params = [{transform_indices = @transform_0, window_bounds = array<i64: 1, 1, 10, 16, 128>}, {pipeline_mode = #tpu.pipeline_mode<synchronous>, transform_indices = @transform_1, window_bounds = array<i64: 128, 128>}, {pipeline_mode = #tpu.pipeline_mode<synchronous>, transform_indices = @transform_2, window_bounds = array<i64: 9, 128>}, {pipeline_mode = #tpu.pipeline_mode<synchronous>, transform_indices = @transform_3, window_bounds = array<i64: 128, 128>}, {pipeline_mode = #tpu.pipeline_mode<synchronous>, transform_indices = @transform_4, window_bounds = array<i64: 1, 128>}, {pipeline_mode = #tpu.pipeline_mode<synchronous>, transform_indices = @transform_5, window_bounds = array<i64: 128, 128>}, {pipeline_mode = #tpu.pipeline_mode<synchronous>, transform_indices = @transform_6, window_bounds = array<i64: 1, 128>}, {transform_indices = @transform_7, window_bounds = array<i64: 1, 8, 16, 128>}]} {
    %c0 = arith.constant 0 : index
    %c0_0 = arith.constant 0 : index
    %c0_1 = arith.constant 0 : index
    %c0_2 = arith.constant 0 : index
    %c0_3 = arith.constant 0 : index
    %0 = vector.load %arg2[%c0, %c0_0, %c0_1, %c0_2, %c0_3] : memref<1x1x10x16x128xf32, #tpu.memory_space<vmem>>, vector<1x1x10x16x128xf32>
    %1 = vector.shape_cast %0 : vector<1x1x10x16x128xf32> to vector<10x16x128xf32>
    %2 = vector.shape_cast %1 : vector<10x16x128xf32> to vector<160x128xf32>
    %3 = arith.truncf %2 : vector<160x128xf32> to vector<160x128xbf16>
    %c0_4 = arith.constant 0 : index
    %c0_5 = arith.constant 0 : index
    %4 = vector.load %arg3[%c0_4, %c0_5] : memref<128x128xbf16, #tpu.memory_space<vmem>>, vector<128x128xbf16>
    %cst = arith.constant dense<0.000000e+00> : vector<160x128xf32>
    %5 = tpu.matmul %3, %4, %cst {dimension_numbers = #tpu.dot_dimension_numbers<[1], [0], [0], [1], [0, 0, 1, 1], [], []>} : vector<160x128xbf16>, vector<128x128xbf16>, vector<160x128xf32> -> vector<160x128xf32>
    %cst_6 = arith.constant 0.000000e+00 : f32
    %6 = vector.broadcast %cst_6 : f32 to vector<160x128xf32>
    %7 = arith.maximumf %5, %6 : vector<160x128xf32>
    %cst_7 = arith.constant 6.000000e+00 : f32
    %8 = vector.broadcast %cst_7 : f32 to vector<160x128xf32>
    %9 = arith.minimumf %7, %8 : vector<160x128xf32>
    %10 = vector.shape_cast %9 : vector<160x128xf32> to vector<10x16x128xf32>
    %cst_8 = arith.constant 0.000000e+00 : f32
    %11 = vector.broadcast %cst_8 : f32 to vector<10x1x128xf32>
    %cst_9 = arith.constant 0.000000e+00 : f32
    %12 = vector.broadcast %cst_9 : f32 to vector<10x1x128xf32>
    %13 = tpu.concatenate %11, %10, %12 in 1 : vector<10x1x128xf32>, vector<10x16x128xf32>, vector<10x1x128xf32> -> vector<10x18x128xf32>
    %14 = vector.extract_strided_slice %13 {offsets = [0, 0, 0], sizes = [10, 16, 128], strides = [1, 1, 1]} : vector<10x18x128xf32> to vector<10x16x128xf32>
    %15 = vector.extract_strided_slice %13 {offsets = [0, 1, 0], sizes = [10, 16, 128], strides = [1, 1, 1]} : vector<10x18x128xf32> to vector<10x16x128xf32>
    %16 = vector.extract_strided_slice %13 {offsets = [0, 2, 0], sizes = [10, 16, 128], strides = [1, 1, 1]} : vector<10x18x128xf32> to vector<10x16x128xf32>
    %c0_10 = arith.constant 0 : index
    %c0_11 = arith.constant 0 : index
    %17 = vector.load %arg4[%c0_10, %c0_11] : memref<9x128xf32, #tpu.memory_space<vmem>>, vector<9x128xf32>
    %cst_12 = arith.constant 0.000000e+00 : f32
    %18 = vector.broadcast %cst_12 : f32 to vector<8x16x128xf32>
    %19 = vector.extract_strided_slice %14 {offsets = [0, 0, 0], sizes = [8, 16, 128], strides = [1, 1, 1]} : vector<10x16x128xf32> to vector<8x16x128xf32>
    %20 = vector.extract_strided_slice %17 {offsets = [0, 0], sizes = [1, 128], strides = [1, 1]} : vector<9x128xf32> to vector<1x128xf32>
    %21 = vector.shape_cast %20 : vector<1x128xf32> to vector<1x1x128xf32>
    %22 = vector.broadcast %21 : vector<1x1x128xf32> to vector<8x16x128xf32>
    %23 = arith.mulf %19, %22 : vector<8x16x128xf32>
    %24 = arith.addf %18, %23 : vector<8x16x128xf32>
    %25 = vector.extract_strided_slice %15 {offsets = [0, 0, 0], sizes = [8, 16, 128], strides = [1, 1, 1]} : vector<10x16x128xf32> to vector<8x16x128xf32>
    %26 = vector.extract_strided_slice %17 {offsets = [1, 0], sizes = [1, 128], strides = [1, 1]} : vector<9x128xf32> to vector<1x128xf32>
    %27 = vector.shape_cast %26 : vector<1x128xf32> to vector<1x1x128xf32>
    %28 = vector.broadcast %27 : vector<1x1x128xf32> to vector<8x16x128xf32>
    %29 = arith.mulf %25, %28 : vector<8x16x128xf32>
    %30 = arith.addf %24, %29 : vector<8x16x128xf32>
    %31 = vector.extract_strided_slice %16 {offsets = [0, 0, 0], sizes = [8, 16, 128], strides = [1, 1, 1]} : vector<10x16x128xf32> to vector<8x16x128xf32>
    %32 = vector.extract_strided_slice %17 {offsets = [2, 0], sizes = [1, 128], strides = [1, 1]} : vector<9x128xf32> to vector<1x128xf32>
    %33 = vector.shape_cast %32 : vector<1x128xf32> to vector<1x1x128xf32>
    %34 = vector.broadcast %33 : vector<1x1x128xf32> to vector<8x16x128xf32>
    %35 = arith.mulf %31, %34 : vector<8x16x128xf32>
    %36 = arith.addf %30, %35 : vector<8x16x128xf32>
    %37 = vector.extract_strided_slice %14 {offsets = [1, 0, 0], sizes = [8, 16, 128], strides = [1, 1, 1]} : vector<10x16x128xf32> to vector<8x16x128xf32>
    %38 = vector.extract_strided_slice %17 {offsets = [3, 0], sizes = [1, 128], strides = [1, 1]} : vector<9x128xf32> to vector<1x128xf32>
    %39 = vector.shape_cast %38 : vector<1x128xf32> to vector<1x1x128xf32>
    %40 = vector.broadcast %39 : vector<1x1x128xf32> to vector<8x16x128xf32>
    %41 = arith.mulf %37, %40 : vector<8x16x128xf32>
    %42 = arith.addf %36, %41 : vector<8x16x128xf32>
    %43 = vector.extract_strided_slice %15 {offsets = [1, 0, 0], sizes = [8, 16, 128], strides = [1, 1, 1]} : vector<10x16x128xf32> to vector<8x16x128xf32>
    %44 = vector.extract_strided_slice %17 {offsets = [4, 0], sizes = [1, 128], strides = [1, 1]} : vector<9x128xf32> to vector<1x128xf32>
    %45 = vector.shape_cast %44 : vector<1x128xf32> to vector<1x1x128xf32>
    %46 = vector.broadcast %45 : vector<1x1x128xf32> to vector<8x16x128xf32>
    %47 = arith.mulf %43, %46 : vector<8x16x128xf32>
    %48 = arith.addf %42, %47 : vector<8x16x128xf32>
    %49 = vector.extract_strided_slice %16 {offsets = [1, 0, 0], sizes = [8, 16, 128], strides = [1, 1, 1]} : vector<10x16x128xf32> to vector<8x16x128xf32>
    %50 = vector.extract_strided_slice %17 {offsets = [5, 0], sizes = [1, 128], strides = [1, 1]} : vector<9x128xf32> to vector<1x128xf32>
    %51 = vector.shape_cast %50 : vector<1x128xf32> to vector<1x1x128xf32>
    %52 = vector.broadcast %51 : vector<1x1x128xf32> to vector<8x16x128xf32>
    %53 = arith.mulf %49, %52 : vector<8x16x128xf32>
    %54 = arith.addf %48, %53 : vector<8x16x128xf32>
    %55 = vector.extract_strided_slice %14 {offsets = [2, 0, 0], sizes = [8, 16, 128], strides = [1, 1, 1]} : vector<10x16x128xf32> to vector<8x16x128xf32>
    %56 = vector.extract_strided_slice %17 {offsets = [6, 0], sizes = [1, 128], strides = [1, 1]} : vector<9x128xf32> to vector<1x128xf32>
    %57 = vector.shape_cast %56 : vector<1x128xf32> to vector<1x1x128xf32>
    %58 = vector.broadcast %57 : vector<1x1x128xf32> to vector<8x16x128xf32>
    %59 = arith.mulf %55, %58 : vector<8x16x128xf32>
    %60 = arith.addf %54, %59 : vector<8x16x128xf32>
    %61 = vector.extract_strided_slice %15 {offsets = [2, 0, 0], sizes = [8, 16, 128], strides = [1, 1, 1]} : vector<10x16x128xf32> to vector<8x16x128xf32>
    %62 = vector.extract_strided_slice %17 {offsets = [7, 0], sizes = [1, 128], strides = [1, 1]} : vector<9x128xf32> to vector<1x128xf32>
    %63 = vector.shape_cast %62 : vector<1x128xf32> to vector<1x1x128xf32>
    %64 = vector.broadcast %63 : vector<1x1x128xf32> to vector<8x16x128xf32>
    %65 = arith.mulf %61, %64 : vector<8x16x128xf32>
    %66 = arith.addf %60, %65 : vector<8x16x128xf32>
    %67 = vector.extract_strided_slice %16 {offsets = [2, 0, 0], sizes = [8, 16, 128], strides = [1, 1, 1]} : vector<10x16x128xf32> to vector<8x16x128xf32>
    %68 = vector.extract_strided_slice %17 {offsets = [8, 0], sizes = [1, 128], strides = [1, 1]} : vector<9x128xf32> to vector<1x128xf32>
    %69 = vector.shape_cast %68 : vector<1x128xf32> to vector<1x1x128xf32>
    %70 = vector.broadcast %69 : vector<1x1x128xf32> to vector<8x16x128xf32>
    %71 = arith.mulf %67, %70 : vector<8x16x128xf32>
    %72 = arith.addf %66, %71 : vector<8x16x128xf32>
    %73 = vector.shape_cast %72 : vector<8x16x128xf32> to vector<128x128xf32>
    %74 = arith.truncf %73 : vector<128x128xf32> to vector<128x128xbf16>
    %c0_13 = arith.constant 0 : index
    %c0_14 = arith.constant 0 : index
    %75 = vector.load %arg5[%c0_13, %c0_14] : memref<128x128xbf16, #tpu.memory_space<vmem>>, vector<128x128xbf16>
    %cst_15 = arith.constant dense<0.000000e+00> : vector<128x128xf32>
    %76 = tpu.matmul %74, %75, %cst_15 {dimension_numbers = #tpu.dot_dimension_numbers<[1], [0], [0], [1], [0, 0, 1, 1], [], []>} : vector<128x128xbf16>, vector<128x128xbf16>, vector<128x128xf32> -> vector<128x128xf32>
    %c0_16 = arith.constant 0 : index
    %c0_17 = arith.constant 0 : index
    %77 = vector.load %arg6[%c0_16, %c0_17] : memref<1x128xf32, #tpu.memory_space<vmem>>, vector<1x128xf32>
    %78 = vector.broadcast %77 : vector<1x128xf32> to vector<128x128xf32>
    %79 = arith.addf %76, %78 : vector<128x128xf32>
    %cst_18 = arith.constant 0.000000e+00 : f32
    %80 = vector.broadcast %cst_18 : f32 to vector<128x128xf32>
    %81 = arith.maximumf %79, %80 : vector<128x128xf32>
    %cst_19 = arith.constant 6.000000e+00 : f32
    %82 = vector.broadcast %cst_19 : f32 to vector<128x128xf32>
    %83 = arith.minimumf %81, %82 : vector<128x128xf32>
    %84 = arith.truncf %83 : vector<128x128xf32> to vector<128x128xbf16>
    %c0_20 = arith.constant 0 : index
    %c0_21 = arith.constant 0 : index
    %85 = vector.load %arg7[%c0_20, %c0_21] : memref<128x128xbf16, #tpu.memory_space<vmem>>, vector<128x128xbf16>
    %cst_22 = arith.constant dense<0.000000e+00> : vector<128x128xf32>
    %86 = tpu.matmul %84, %85, %cst_22 {dimension_numbers = #tpu.dot_dimension_numbers<[1], [0], [0], [1], [0, 0, 1, 1], [], []>} : vector<128x128xbf16>, vector<128x128xbf16>, vector<128x128xf32> -> vector<128x128xf32>
    %c0_23 = arith.constant 0 : index
    %c0_24 = arith.constant 0 : index
    %87 = vector.load %arg8[%c0_23, %c0_24] : memref<1x128xf32, #tpu.memory_space<vmem>>, vector<1x128xf32>
    %88 = vector.broadcast %87 : vector<1x128xf32> to vector<128x128xf32>
    %89 = arith.addf %86, %88 : vector<128x128xf32>
    %90 = vector.extract_strided_slice %1 {offsets = [1, 0, 0], sizes = [8, 16, 128], strides = [1, 1, 1]} : vector<10x16x128xf32> to vector<8x16x128xf32>
    %91 = vector.shape_cast %90 : vector<8x16x128xf32> to vector<128x128xf32>
    %92 = arith.addf %89, %91 : vector<128x128xf32>
    %93 = vector.shape_cast %92 : vector<128x128xf32> to vector<8x16x128xf32>
    %c0_25 = arith.constant 0 : index
    %c0_26 = arith.constant 0 : index
    %c0_27 = arith.constant 0 : index
    %c0_28 = arith.constant 0 : index
    %94 = vector.load %arg9[%c0_25, %c0_26, %c0_27, %c0_28] : memref<1x8x16x128xf32, #tpu.memory_space<vmem>>, vector<1x8x16x128xf32>
    %95 = vector.shape_cast %94 : vector<1x8x16x128xf32> to vector<8x16x128xf32>
    %96 = vector.shape_cast %93 : vector<8x16x128xf32> to vector<1x8x16x128xf32>
    tpu.vector_store %arg9[%c0_25, %c0_26, %c0_27, %c0_28], %96 {strides = array<i32>} : memref<1x8x16x128xf32, #tpu.memory_space<vmem>>, vector<1x8x16x128xf32>,
    return
  }
  func.func @transform_0(%arg0: i32, %arg1: i32) -> (i32, i32, i32, i32, i32) {
    %c0_i32 = arith.constant 0 : i32
    %c0_i32_0 = arith.constant 0 : i32
    %c0_i32_1 = arith.constant 0 : i32
    %c0_i32_2 = arith.constant 0 : i32
    return %arg0, %arg1, %c0_i32, %c0_i32_0, %c0_i32_1 : i32, i32, i32, i32, i32
  }
  func.func @transform_1(%arg0: i32, %arg1: i32) -> (i32, i32) {
    %c0_i32 = arith.constant 0 : i32
    %c0_i32_0 = arith.constant 0 : i32
    %c0_i32_1 = arith.constant 0 : i32
    return %c0_i32, %c0_i32_0 : i32, i32
  }
  func.func @transform_2(%arg0: i32, %arg1: i32) -> (i32, i32) {
    %c0_i32 = arith.constant 0 : i32
    %c0_i32_0 = arith.constant 0 : i32
    %c0_i32_1 = arith.constant 0 : i32
    return %c0_i32, %c0_i32_0 : i32, i32
  }
  func.func @transform_3(%arg0: i32, %arg1: i32) -> (i32, i32) {
    %c0_i32 = arith.constant 0 : i32
    %c0_i32_0 = arith.constant 0 : i32
    %c0_i32_1 = arith.constant 0 : i32
    return %c0_i32, %c0_i32_0 : i32, i32
  }
  func.func @transform_4(%arg0: i32, %arg1: i32) -> (i32, i32) {
    %c0_i32 = arith.constant 0 : i32
    %c0_i32_0 = arith.constant 0 : i32
    %c0_i32_1 = arith.constant 0 : i32
    return %c0_i32, %c0_i32_0 : i32, i32
  }
  func.func @transform_5(%arg0: i32, %arg1: i32) -> (i32, i32) {
    %c0_i32 = arith.constant 0 : i32
    %c0_i32_0 = arith.constant 0 : i32
    %c0_i32_1 = arith.constant 0 : i32
    return %c0_i32, %c0_i32_0 : i32, i32
  }
  func.func @transform_6(%arg0: i32, %arg1: i32) -> (i32, i32) {
    %c0_i32 = arith.constant 0 : i32
    %c0_i32_0 = arith.constant 0 : i32
    %c0_i32_1 = arith.constant 0 : i32
    return %c0_i32, %c0_i32_0 : i32, i32
  }
  func.func @transform_7(%arg0: i32, %arg1: i32) -> (i32, i32, i32, i32) {
    %c0_i32 = arith.constant 0 : i32
    %c0_i32_0 = arith.constant 0 : i32
    %c0_i32_1 = arith.constant 0 : i32
    return %arg0, %arg1, %c0_i32, %c0_i32_0 : i32, i32, i32, i32
  }
}

</mosaic_0001>

<llo_original>
// kernel: tpu_custom_call.1
$region0: #{tpu_custom_call.1}
  #allocation0 [shape = 'u32[]', space=smem, size = 0x4, offset = 0x4, fixed_abs, tag = 'smem constant byte address 0x4 - core index']
  #allocation1 [shape = 'u32[144,128]{1,0:T(1,128)}', space=vmem, size = 0x12000, scoped, tag = 'internal scratch']
  %s0 = inlined_call_operand.hbm [shape: f32[2,2,10,16,128], index: 0, kind: input, shape index: {}]
  %s1 = inlined_call_operand.hbm [shape: bf16[128,128], index: 1, kind: input, shape index: {}]
  %s2 = inlined_call_operand.hbm [shape: f32[9,128], index: 2, kind: input, shape index: {}]
  %s3 = inlined_call_operand.hbm [shape: bf16[128,128], index: 3, kind: input, shape index: {}]
  %s4 = inlined_call_operand.vmem [shape: f32[1,128], index: 4, kind: input, shape index: {}]
  %s5 = inlined_call_operand.hbm [shape: bf16[128,128], index: 5, kind: input, shape index: {}]
  %s6 = inlined_call_operand.vmem [shape: f32[1,128], index: 6, kind: input, shape index: {}]
  %s7 = inlined_call_operand.hbm [shape: f32[2,16,16,128], index: 7, kind: output, shape index: {}]
  %s8 = sld [smem:[#allocation0]]
  $region81: #{tpu_custom_call.1} parent=0
    _
  %s10 = ssub.s32 1, %s8
  %s11 = scalar_select 0, %s10, %s8
  $region1: #{tpu_custom_call.1} parent=0
    #allocation2 [shape = 'u8[163840]{0}', space=vmem, size = 0x28000, scoped, tag = 'input window, operand 0']
    #allocation3 [shape = 's32[2]{0}', space=sflag, size = 0x8, scoped, tag = 'scoped memory for tpu_custom_call.1']
    #allocation4 [shape = 's32[2]{0}', space=sflag, size = 0x8, scoped, tag = 'scoped memory for tpu_custom_call.1']
    #allocation5 [shape = 'u8[32768]{0}', space=vmem, size = 0x8000, scoped, tag = 'input window, operand 1, single buffered']
    #allocation6 [shape = 's32[1]{0}', space=sflag, size = 0x4, scoped, tag = 'scoped memory for tpu_custom_call.1']
    #allocation7 [shape = 'u8[8192]{0}', space=vmem, size = 0x2000, scoped, tag = 'input window, operand 2, single buffered']
    #allocation8 [shape = 'u8[32768]{0}', space=vmem, size = 0x8000, scoped, tag = 'input window, operand 3, single buffered']
    #allocation9 [shape = 's32[1]{0}', space=sflag, size = 0x4, scoped, tag = 'scoped memory for tpu_custom_call.1']
    #allocation10 [shape = 'u8[32768]{0}', space=vmem, size = 0x8000, scoped, tag = 'input window, operand 5, single buffered']
    #allocation11 [shape = 'u8[131072]{0}', space=vmem, size = 0x20000, scoped, tag = 'output window, operand 0']
    %12 = vsyncpa [#allocation3], 0
    %s13 = scalar_lea.sflag [#allocation3], 1
    %14 = vsyncpa %s13, 0
    %15 = vsyncpa [#allocation6], 0
    %16 = vsyncpa [#allocation9], 0
    %17 = vsyncpa [#allocation4], 0
    %s18 = scalar_lea.sflag [#allocation4], 1
    %19 = vsyncpa %s18, 0
    loop: start=0, step=1, limit=6
    $region2: #{tpu_custom_call.1} parent=1 // loop_pre_header
      _
    $region3: #{tpu_custom_call.1} parent=1 // loop_header
      %s21 = sphi 0, %s25
      %p22 = scmp.ge.s32.totalorder %s21, 6
      %s28 = sphi 0, %s40
      %s29 = sphi 0, %s36
      %s30 = sphi 0, %s28
      %s31 = sphi 0, %s29
      %s32 = sphi 0, %s30
      %s33 = sphi 0, %s31
      %s45 = sphi 0, %s47
      %s48 = sphi 0, %s45
      %s49 = sphi 0, %s48
      %s65 = sphi 0, %s49
      %s69 = sphi 0, %s69
      %s71 = sphi 0, %s69
      %s72 = sphi 0, %s71
      %s86 = sphi 0, %s72
      %s90 = sphi 0, %s90
      %s92 = sphi 0, %s90
      %s93 = sphi 0, %s92
      %s107 = sphi 0, %s93
      %s111 = sphi 0, %s111
      %s113 = sphi 0, %s111
      %s114 = sphi 0, %s113
      %s128 = sphi 0, %s114
      %s132 = sphi 0, %s132
      %s134 = sphi 0, %s132
      %s135 = sphi 0, %s134
      %s149 = sphi 0, %s135
      %s153 = sphi 0, %s153
      %s155 = sphi 0, %s153
      %s156 = sphi 0, %s155
      %s170 = sphi 0, %s156
      %s174 = sphi 0, %s174
      %s176 = sphi 0, %s174
      %s177 = sphi 0, %s176
      %s191 = sphi 0, %s177
      %s199 = sphi 0, %s201
      %s202 = sphi 0, %s199
      %s203 = sphi 0, %s202
      %s219 = sphi 0, %s203
    $region4: #{tpu_custom_call.1} parent=1 // loop_header_branch
      %24 = sbr.rel (%p22) target = $region8
    $region5: #{tpu_custom_call.1} parent=1 // loop_body
      %s26 = ssub.s32 %s21, 1
      %s27 = ssub.s32 %s21, 2
      %s34 = sadd.s32 1, %s29
      %p35 = scmp.ge.s32.totalorder %s34, 2
      %s36 = scalar_select %p35, 0, %s34
      %s37 = sadd.s32 1, %s28
      %s38 = scalar_select %p35, %s37, %s28
      %p39 = scmp.ge.s32.totalorder %s38, 2
      %s40 = scalar_select %p39, 0, %s38
      %s41 = ssub.s32 %s28, %s40
      %s42 = ssub.s32 %s29, %s36
      %s43 = sor.u32 %s41, %s42
      %p44 = scmp.eq.s32.totalorder %s43, 0
      %s46 = sadd.s32 %s45, 1
      %s47 = scalar_select %p44, %s45, %s46
      %p50 = pneg %p44
      %p51 = scmp.eq.s32.totalorder %s21, 3
      %p52 = por %p50, %p51
      %p53 = scmp.ne.s32.totalorder %s45, %s48
      %p54 = scmp.eq.s32.totalorder %s21, 0
      %p55 = por %p53, %p54
      %p56 = scmp.ne.s32.totalorder %s45, %s48
      %p57 = scmp.eq.s32.totalorder %s26, 3
      %p58 = por %p56, %p57
      %p59 = scmp.ne.s32.totalorder %s48, %s49
      %p60 = scmp.eq.s32.totalorder %s26, 0
      %p61 = por %p59, %p60
      %p62 = scmp.ne.s32.totalorder %s48, %s49
      %p63 = scmp.eq.s32.totalorder %s27, 3
      %p64 = por %p62, %p63
      %p66 = scmp.ne.s32.totalorder %s49, %s65
      %p67 = scmp.eq.s32.totalorder %s27, 0
      %p68 = por %p66, %p67
      %s70 = sadd.s32 %s69, 1
      %p73 = scmp.eq.s32.totalorder %s21, 3
      %p74 = scmp.ne.s32.totalorder %s69, %s71
      %p75 = scmp.eq.s32.totalorder %s21, 0
      %p76 = por %p74, %p75
      %p77 = scmp.ne.s32.totalorder %s69, %s71
      %p78 = scmp.eq.s32.totalorder %s26, 3
      %p79 = por %p77, %p78
      %p80 = scmp.ne.s32.totalorder %s71, %s72
      %p81 = scmp.eq.s32.totalorder %s26, 0
      %p82 = por %p80, %p81
      %p83 = scmp.ne.s32.totalorder %s71, %s72
      %p84 = scmp.eq.s32.totalorder %s27, 3
      %p85 = por %p83, %p84
      %p87 = scmp.ne.s32.totalorder %s72, %s86
      %p88 = scmp.eq.s32.totalorder %s27, 0
      %p89 = por %p87, %p88
      %s91 = sadd.s32 %s90, 1
      %p94 = scmp.eq.s32.totalorder %s21, 3
      %p95 = scmp.ne.s32.totalorder %s90, %s92
      %p96 = scmp.eq.s32.totalorder %s21, 0
      %p97 = por %p95, %p96
      %p98 = scmp.ne.s32.totalorder %s90, %s92
      %p99 = scmp.eq.s32.totalorder %s26, 3
      %p100 = por %p98, %p99
      %p101 = scmp.ne.s32.totalorder %s92, %s93
      %p102 = scmp.eq.s32.totalorder %s26, 0
      %p103 = por %p101, %p102
      %p104 = scmp.ne.s32.totalorder %s92, %s93
      %p105 = scmp.eq.s32.totalorder %s27, 3
      %p106 = por %p104, %p105
      %p108 = scmp.ne.s32.totalorder %s93, %s107
      %p109 = scmp.eq.s32.totalorder %s27, 0
      %p110 = por %p108, %p109
      %s112 = sadd.s32 %s111, 1
      %p115 = scmp.eq.s32.totalorder %s21, 3
      %p116 = scmp.ne.s32.totalorder %s111, %s113
      %p117 = scmp.eq.s32.totalorder %s21, 0
      %p118 = por %p116, %p117
      %p119 = scmp.ne.s32.totalorder %s111, %s113
      %p120 = scmp.eq.s32.totalorder %s26, 3
      %p121 = por %p119, %p120
      %p122 = scmp.ne.s32.totalorder %s113, %s114
      %p123 = scmp.eq.s32.totalorder %s26, 0
      %p124 = por %p122, %p123
      %p125 = scmp.ne.s32.totalorder %s113, %s114
      %p126 = scmp.eq.s32.totalorder %s27, 3
      %p127 = por %p125, %p126
      %p129 = scmp.ne.s32.totalorder %s114, %s128
      %p130 = scmp.eq.s32.totalorder %s27, 0
      %p131 = por %p129, %p130
      %s133 = sadd.s32 %s132, 1
      %p136 = scmp.eq.s32.totalorder %s21, 3
      %p137 = scmp.ne.s32.totalorder %s132, %s134
      %p138 = scmp.eq.s32.totalorder %s21, 0
      %p139 = por %p137, %p138
      %p140 = scmp.ne.s32.totalorder %s132, %s134
      %p141 = scmp.eq.s32.totalorder %s26, 3
      %p142 = por %p140, %p141
      %p143 = scmp.ne.s32.totalorder %s134, %s135
      %p144 = scmp.eq.s32.totalorder %s26, 0
      %p145 = por %p143, %p144
      %p146 = scmp.ne.s32.totalorder %s134, %s135
      %p147 = scmp.eq.s32.totalorder %s27, 3
      %p148 = por %p146, %p147
      %p150 = scmp.ne.s32.totalorder %s135, %s149
      %p151 = scmp.eq.s32.totalorder %s27, 0
      %p152 = por %p150, %p151
      %s154 = sadd.s32 %s153, 1
      %p157 = scmp.eq.s32.totalorder %s21, 3
      %p158 = scmp.ne.s32.totalorder %s153, %s155
      %p159 = scmp.eq.s32.totalorder %s21, 0
      %p160 = por %p158, %p159
      %p161 = scmp.ne.s32.totalorder %s153, %s155
      %p162 = scmp.eq.s32.totalorder %s26, 3
      %p163 = por %p161, %p162
      %p164 = scmp.ne.s32.totalorder %s155, %s156
      %p165 = scmp.eq.s32.totalorder %s26, 0
      %p166 = por %p164, %p165
      %p167 = scmp.ne.s32.totalorder %s155, %s156
      %p168 = scmp.eq.s32.totalorder %s27, 3
      %p169 = por %p167, %p168
      %p171 = scmp.ne.s32.totalorder %s156, %s170
      %p172 = scmp.eq.s32.totalorder %s27, 0
      %p173 = por %p171, %p172
      %s175 = sadd.s32 %s174, 1
      %p178 = scmp.eq.s32.totalorder %s21, 3
      %p179 = scmp.ne.s32.totalorder %s174, %s176
      %p180 = scmp.eq.s32.totalorder %s21, 0
      %p181 = por %p179, %p180
      %p182 = scmp.ne.s32.totalorder %s174, %s176
      %p183 = scmp.eq.s32.totalorder %s26, 3
      %p184 = por %p182, %p183
      %p185 = scmp.ne.s32.totalorder %s176, %s177
      %p186 = scmp.eq.s32.totalorder %s26, 0
      %p187 = por %p185, %p186
      %p188 = scmp.ne.s32.totalorder %s176, %s177
      %p189 = scmp.eq.s32.totalorder %s27, 3
      %p190 = por %p188, %p189
      %p192 = scmp.ne.s32.totalorder %s177, %s191
      %p193 = scmp.eq.s32.totalorder %s27, 0
      %p194 = por %p192, %p193
      %s195 = ssub.s32 %s28, %s40
      %s196 = ssub.s32 %s29, %s36
      %s197 = sor.u32 %s195, %s196
      %p198 = scmp.eq.s32.totalorder %s197, 0
      %s200 = sadd.s32 %s199, 1
      %s201 = scalar_select %p198, %s199, %s200
      %p204 = pneg %p198
      %p205 = scmp.eq.s32.totalorder %s21, 3
      %p206 = por %p204, %p205
      %p207 = scmp.ne.s32.totalorder %s199, %s202
      %p208 = scmp.eq.s32.totalorder %s21, 0
      %p209 = por %p207, %p208
      %p210 = scmp.ne.s32.totalorder %s199, %s202
      %p211 = scmp.eq.s32.totalorder %s26, 3
      %p212 = por %p210, %p211
      %p213 = scmp.ne.s32.totalorder %s202, %s203
      %p214 = scmp.eq.s32.totalorder %s26, 0
      %p215 = por %p213, %p214
      %p216 = scmp.ne.s32.totalorder %s202, %s203
      %p217 = scmp.eq.s32.totalorder %s27, 3
      %p218 = por %p216, %p217
      %p220 = scmp.ne.s32.totalorder %s203, %s219
      %p221 = scmp.eq.s32.totalorder %s27, 0
      %p222 = por %p220, %p221
      %p223 = scmp.le.s32.totalorder 1, %s21
      %p224 = scmp.lt.s32.totalorder %s21, 5
      %p225 = pnand %p223, %p224
      %p226 = pneg %p225
      // Predicated region
      $region9: #{tpu_custom_call.1} parent=5 // pred_check
        _
      $region10: #{tpu_custom_call.1} parent=5 // pred_check_branch
        %228 = sbr.rel (%p225) target = $region12
      $region11: #{tpu_custom_call.1} parent=5 // pred_region
        %s229 = ssub.s32 %s21, 1
        // Predicated region
        $region13: #{tpu_custom_call.1} parent=11 // pred_check
          %p230 = pneg %p82
        $region14: #{tpu_custom_call.1} parent=11 // pred_check_branch
          %232 = sbr.rel (%p230) target = $region16
        $region15: #{tpu_custom_call.1} parent=11 // pred_region
          %s234 = ssub.s32 1024, 1024
          %235 = vsyncadd [#allocation6], %s234
          %s236 = sshll.u32 [#allocation5], 4
          %s237 = int_to_ptr.vmem [resolvable:$true] %s236
          %242 = dma.hbm_to_vmem [thread:$0]  %s1, 1024, %s237, [#allocation6], 64, 64, 4
        $region16: #{tpu_custom_call.1} parent=11 // pred_fallthru
          _
        // Predicated region
        $region17: #{tpu_custom_call.1} parent=11 // pred_check
          %p243 = pneg %p103
        $region18: #{tpu_custom_call.1} parent=11 // pred_check_branch
          %245 = sbr.rel (%p243) target = $region20
        $region19: #{tpu_custom_call.1} parent=11 // pred_region
          %s247 = ssub.s32 256, 256
          %248 = vsyncadd [#allocation6], %s247
          %s249 = sshll.u32 [#allocation7], 4
          %s250 = int_to_ptr.vmem [resolvable:$true] %s249
          %255 = dma.hbm_to_vmem [thread:$0]  %s2, 256, %s250, [#allocation6], 128, 128, 8
        $region20: #{tpu_custom_call.1} parent=11 // pred_fallthru
          _
        // Predicated region
        $region21: #{tpu_custom_call.1} parent=11 // pred_check
          %p256 = pneg %p124
        $region22: #{tpu_custom_call.1} parent=11 // pred_check_branch
          %258 = sbr.rel (%p256) target = $region24
        $region23: #{tpu_custom_call.1} parent=11 // pred_region
          %s260 = ssub.s32 1024, 1024
          %261 = vsyncadd [#allocation9], %s260
          %s262 = sshll.u32 [#allocation8], 4
          %s263 = int_to_ptr.vmem [resolvable:$true] %s262
          %268 = dma.hbm_to_vmem [thread:$0]  %s3, 1024, %s263, [#allocation9], 64, 64, 4
        $region24: #{tpu_custom_call.1} parent=11 // pred_fallthru
          _
        // Predicated region
        $region25: #{tpu_custom_call.1} parent=11 // pred_check
          %p269 = pneg %p145
        $region26: #{tpu_custom_call.1} parent=11 // pred_check_branch
          %271 = sbr.rel (%p269) target = $region28
        $region27: #{tpu_custom_call.1} parent=11 // pred_region
          _
        $region28: #{tpu_custom_call.1} parent=11 // pred_fallthru
          _
        // Predicated region
        $region29: #{tpu_custom_call.1} parent=11 // pred_check
          %p272 = pneg %p166
        $region30: #{tpu_custom_call.1} parent=11 // pred_check_branch
          %274 = sbr.rel (%p272) target = $region32
        $region31: #{tpu_custom_call.1} parent=11 // pred_region
          %s276 = ssub.s32 1024, 1024
          %277 = vsyncadd [#allocation9], %s276
          %s278 = sshll.u32 [#allocation10], 4
          %s279 = int_to_ptr.vmem [resolvable:$true] %s278
          %284 = dma.hbm_to_vmem [thread:$0]  %s5, 1024, %s279, [#allocation9], 64, 64, 4
        $region32: #{tpu_custom_call.1} parent=11 // pred_fallthru
          _
        // Predicated region
        $region33: #{tpu_custom_call.1} parent=11 // pred_check
          %p285 = pneg %p187
        $region34: #{tpu_custom_call.1} parent=11 // pred_check_branch
          %287 = sbr.rel (%p285) target = $region36
        $region35: #{tpu_custom_call.1} parent=11 // pred_region
          _
        $region36: #{tpu_custom_call.1} parent=11 // pred_fallthru
          _
      $region12: #{tpu_custom_call.1} parent=5 // pred_fallthru
        _
      %p288 = scmp.lt.s32.totalorder %s21, 4
      // Predicated region
      $region37: #{tpu_custom_call.1} parent=5 // pred_check
        %p289 = pneg %p288
      $region38: #{tpu_custom_call.1} parent=5 // pred_check_branch
        %291 = sbr.rel (%p289) target = $region40
      $region39: #{tpu_custom_call.1} parent=5 // pred_region
        // Predicated region
        $region41: #{tpu_custom_call.1} parent=39 // pred_check
          %p292 = pneg %p55
        $region42: #{tpu_custom_call.1} parent=39 // pred_check_branch
          %294 = sbr.rel (%p292) target = $region44
        $region43: #{tpu_custom_call.1} parent=39 // pred_region
          %s295 = sand.u32 %s45, 1
          %s296 = scalar_lea.sflag [#allocation3], %s295
          %s297 = sand.u32 %s45, 1
          %s298 = smul.addr %s297, 160
          %s299 = scalar_lea.vmem [#allocation2], %s298
          %s301 = ssub.s32 2560, 2560
          %302 = vsyncadd %s296, %s301
          %s303 = smul.addr %s29, 20
          %s304 = smul.addr %s28, 40
          %s305 = sadd.s32 %s303, %s304
          %s306 = smul.addr %s305, 128
          %s307 = scalar_lea.hbm %s0, %s306
          %s308 = sshll.u32 %s299, 4
          %s309 = int_to_ptr.vmem [resolvable:$true] %s308
          %314 = dma.hbm_to_vmem [thread:$0]  %s307, 2560, %s309, %s296, 128, 128, 8
        $region44: #{tpu_custom_call.1} parent=39 // pred_fallthru
          _
      $region40: #{tpu_custom_call.1} parent=5 // pred_fallthru
        _
      %p315 = scmp.le.s32.totalorder 1, %s21
      %p316 = scmp.lt.s32.totalorder %s21, 5
      %p317 = pnand %p315, %p316
      %p318 = pneg %p317
      // Predicated region
      $region45: #{tpu_custom_call.1} parent=5 // pred_check
        _
      $region46: #{tpu_custom_call.1} parent=5 // pred_check_branch
        %320 = sbr.rel (%p317) target = $region48
      $region47: #{tpu_custom_call.1} parent=5 // pred_region
        %s321 = ssub.s32 %s21, 1
        %s322 = sand.u32 %s48, 1
        %s323 = scalar_lea.sflag [#allocation3], %s322
        %s324 = sand.u32 %s48, 1
        %s325 = smul.addr %s324, 160
        %s326 = scalar_lea.vmem [#allocation2], %s325
        // Predicated region
        $region49: #{tpu_custom_call.1} parent=47 // pred_check
          %p327 = pneg %p61
        $region50: #{tpu_custom_call.1} parent=47 // pred_check_branch
          %329 = sbr.rel (%p327) target = $region52
        $region51: #{tpu_custom_call.1} parent=47 // pred_region
          %330 = dma.done %s323, 2560
        $region52: #{tpu_custom_call.1} parent=47 // pred_fallthru
          _
        // Predicated region
        $region53: #{tpu_custom_call.1} parent=47 // pred_check
          %p331 = pneg %p82
        $region54: #{tpu_custom_call.1} parent=47 // pred_check_branch
          %333 = sbr.rel (%p331) target = $region56
        $region55: #{tpu_custom_call.1} parent=47 // pred_region
          %334 = dma.done [#allocation6], 1024
        $region56: #{tpu_custom_call.1} parent=47 // pred_fallthru
          _
        // Predicated region
        $region57: #{tpu_custom_call.1} parent=47 // pred_check
          %p335 = pneg %p103
        $region58: #{tpu_custom_call.1} parent=47 // pred_check_branch
          %337 = sbr.rel (%p335) target = $region60
        $region59: #{tpu_custom_call.1} parent=47 // pred_region
          %338 = dma.done [#allocation6], 256
        $region60: #{tpu_custom_call.1} parent=47 // pred_fallthru
          _
        // Predicated region
        $region61: #{tpu_custom_call.1} parent=47 // pred_check
          %p339 = pneg %p124
        $region62: #{tpu_custom_call.1} parent=47 // pred_check_branch
          %341 = sbr.rel (%p339) target = $region64
        $region63: #{tpu_custom_call.1} parent=47 // pred_region
          %342 = dma.done [#allocation9], 1024
        $region64: #{tpu_custom_call.1} parent=47 // pred_fallthru
          _
        // Predicated region
        $region65: #{tpu_custom_call.1} parent=47 // pred_check
          %p343 = pneg %p166
        $region66: #{tpu_custom_call.1} parent=47 // pred_check_branch
          %345 = sbr.rel (%p343) target = $region68
        $region67: #{tpu_custom_call.1} parent=47 // pred_region
          %346 = dma.done [#allocation9], 1024
        $region68: #{tpu_custom_call.1} parent=47 // pred_fallthru
          _
        %s347 = sand.u32 %s48, 1
        %s348 = scalar_lea.sflag [#allocation3], %s347
        %s349 = sand.u32 %s48, 1
        %s350 = smul.addr %s349, 160
        %s351 = scalar_lea.vmem [#allocation2], %s350
        %p352 = pneg %p61
        %p353 = pneg %p58
        %p354 = pneg %p82
        %p355 = pneg %p79
        %p356 = pneg %p103
        %p357 = pneg %p100
        %p358 = pneg %p124
        %p359 = pneg %p121
        %p360 = pneg %p145
        %p361 = pneg %p142
        %p362 = pneg %p166
        %p363 = pneg %p163
        %p364 = pneg %p187
        %p365 = pneg %p184
        %p366 = pneg %p215
        %p367 = pneg %p212
        %s368 = sand.u32 %s202, 1
        %s369 = scalar_lea.sflag [#allocation4], %s368
        %s370 = sand.u32 %s202, 1
        %s371 = smul.addr %s370, 128
        %s372 = scalar_lea.vmem [#allocation11], %s371
        %s373 = smul.u32 8, %s31
        %v375 = vld [vmem:[%s326] sm:$0xff]
        %v376 = vld [vmem:[%s326 + $0x8] sm:$0xff]
        %v377 = vld [vmem:[%s326 + $0x10] sm:$0xff]
        %v378 = vld [vmem:[%s326 + $0x18] sm:$0xff]
        %v379 = vld [vmem:[%s326 + $0x20] sm:$0xff]
        %v380 = vld [vmem:[%s326 + $0x28] sm:$0xff]
        %v381 = vld [vmem:[%s326 + $0x30] sm:$0xff]
        %v382 = vld [vmem:[%s326 + $0x38] sm:$0xff]
        %v383 = vld [vmem:[%s326 + $0x40] sm:$0xff]
        %v384 = vld [vmem:[%s326 + $0x48] sm:$0xff]
        %v385 = vld [vmem:[%s326 + $0x50] sm:$0xff]
        %v386 = vld [vmem:[%s326 + $0x58] sm:$0xff]
        %v387 = vld [vmem:[%s326 + $0x60] sm:$0xff]
        %v388 = vld [vmem:[%s326 + $0x68] sm:$0xff]
        %v389 = vld [vmem:[%s326 + $0x70] sm:$0xff]
        %v390 = vld [vmem:[%s326 + $0x78] sm:$0xff]
        %v391 = vld [vmem:[%s326 + $0x80] sm:$0xff]
        %v392 = vld [vmem:[%s326 + $0x88] sm:$0xff]
        %v393 = vld [vmem:[%s326 + $0x90] sm:$0xff]
        %v394 = vld [vmem:[%s326 + $0x98] sm:$0xff]
        %v395 = vpack.c.bf16 %v376, %v375
        %v396 = vpack.c.bf16 %v378, %v377
        %v397 = vpack.c.bf16 %v380, %v379
        %v398 = vpack.c.bf16 %v382, %v381
        %v399 = vpack.c.bf16 %v384, %v383
        %v400 = vpack.c.bf16 %v386, %v385
        %v401 = vpack.c.bf16 %v388, %v387
        %v402 = vpack.c.bf16 %v390, %v389
        %v403 = vpack.c.bf16 %v392, %v391
        %v404 = vpack.c.bf16 %v394, %v393
        %v405 = vld [vmem:[#allocation5] sm:$0xf]
        %v406 = vld [vmem:[#allocation5 + $0x4] sm:$0xf]
        %v407 = vld [vmem:[#allocation5 + $0x8] sm:$0xf]
        %v408 = vld [vmem:[#allocation5 + $0xc] sm:$0xf]
        %v409 = vld [vmem:[#allocation5 + $0x10] sm:$0xf]
        %v410 = vld [vmem:[#allocation5 + $0x14] sm:$0xf]
        %v411 = vld [vmem:[#allocation5 + $0x18] sm:$0xf]
        %v412 = vld [vmem:[#allocation5 + $0x1c] sm:$0xf]
        %v413 = vld [vmem:[#allocation5 + $0x20] sm:$0xf]
        %v414 = vld [vmem:[#allocation5 + $0x24] sm:$0xf]
        %v415 = vld [vmem:[#allocation5 + $0x28] sm:$0xf]
        %v416 = vld [vmem:[#allocation5 + $0x2c] sm:$0xf]
        %v417 = vld [vmem:[#allocation5 + $0x30] sm:$0xf]
        %v418 = vld [vmem:[#allocation5 + $0x34] sm:$0xf]
        %v419 = vld [vmem:[#allocation5 + $0x38] sm:$0xf]
        %v420 = vld [vmem:[#allocation5 + $0x3c] sm:$0xf]
        %v437 = vunpack.c.l.b16 %v405
        %v438 = vunpack.c.l.b16 %v406
        %v439 = vunpack.c.l.b16 %v407
        %v440 = vunpack.c.l.b16 %v408
        %v441 = vunpack.c.l.b16 %v409
        %v442 = vunpack.c.l.b16 %v410
        %v443 = vunpack.c.l.b16 %v411
        %v444 = vunpack.c.l.b16 %v412
        %v445 = vunpack.c.l.b16 %v413
        %v446 = vunpack.c.l.b16 %v414
        %v447 = vunpack.c.l.b16 %v415
        %v448 = vunpack.c.l.b16 %v416
        %v449 = vunpack.c.l.b16 %v417
        %v450 = vunpack.c.l.b16 %v418
        %v451 = vunpack.c.l.b16 %v419
        %v452 = vunpack.c.l.b16 %v420
        %v453 = vpack.c.b16 %v438, %v437
        %v454 = vpack.c.b16 %v440, %v439
        %v455 = vpack.c.b16 %v442, %v441
        %v456 = vpack.c.b16 %v444, %v443
        %v457 = vpack.c.b16 %v446, %v445
        %v458 = vpack.c.b16 %v448, %v447
        %v459 = vpack.c.b16 %v450, %v449
        %v460 = vpack.c.b16 %v452, %v451
        %469 = vmatprep.subr.bf16.mxu0 0
        %470 = vmatpush1.bf16.msra.mxu0 %v453
        %471 = vmatprep.subr.bf16.mxu0 0
        %472 = vmatpush1.bf16.msra.mxu0 %v454
        %473 = vmatprep.subr.bf16.mxu0 0
        %474 = vmatpush1.bf16.msra.mxu0 %v455
        %475 = vmatprep.subr.bf16.mxu0 0
        %476 = vmatpush1.bf16.msra.mxu0 %v456
        %477 = vmatprep.subr.bf16.mxu0 0
        %478 = vmatpush1.bf16.msra.mxu0 %v457
        %479 = vmatprep.subr.bf16.mxu0 0
        %480 = vmatpush1.bf16.msra.mxu0 %v458
        %481 = vmatprep.subr.bf16.mxu0 0
        %482 = vmatpush1.bf16.msra.mxu0 %v459
        %483 = vmatprep.subr.bf16.mxu0 0
        %484 = vmatpush1.bf16.msra.mxu0 %v460
        %485 = vmatprep.subr.bf16.mxu0 0
        %486 = vmatpush1.bf16.msra.mxu0 0
        %487 = vmatprep.subr.bf16.mxu0 0
        %488 = vmatpush1.bf16.msra.mxu0 0
        %489 = vmatprep.subr.bf16.mxu0 0
        %490 = vmatpush1.bf16.msra.mxu0 0
        %491 = vmatprep.subr.bf16.mxu0 0
        %492 = vmatpush1.bf16.msra.mxu0 0
        %493 = vmatprep.subr.bf16.mxu0 0
        %494 = vmatpush1.bf16.msra.mxu0 0
        %495 = vmatprep.subr.bf16.mxu0 0
        %496 = vmatpush1.bf16.msra.mxu0 0
        %497 = vmatprep.subr.bf16.mxu0 0
        %498 = vmatpush1.bf16.msra.mxu0 0
        %499 = vmatprep.subr.bf16.mxu0 0
        %500 = vmatpush1.bf16.msra.mxu0 0
        %501 = vmatprep.mubr.bf16.mxu0 0
        %502 = vmatmul.mubr.bf16.gmra.mrb[0].mxu0 %v395
        %v503 = vpop.f32.mrb[0].mxu0
        %v504 = vadd.f32 0.0, %v503
        %v505 = vpop.f32.mrb[0].mxu0
        %v506 = vpop.f32.mrb[0].mxu0
        %v507 = vadd.f32 0.0, %v506
        %v508 = vpop.f32.mrb[0].mxu0
        %509 = vmatprep.mubr.bf16.mxu0 0
        %510 = vmatmul.mubr.bf16.gmra.mrb[0].mxu0 %v396
        %v511 = vpop.f32.mrb[0].mxu0
        %v512 = vadd.f32 0.0, %v511
        %v513 = vpop.f32.mrb[0].mxu0
        %v514 = vpop.f32.mrb[0].mxu0
        %v515 = vadd.f32 0.0, %v514
        %v516 = vpop.f32.mrb[0].mxu0
        %517 = vmatprep.mubr.bf16.mxu0 0
        %518 = vmatmul.mubr.bf16.gmra.mrb[0].mxu0 %v397
        %v519 = vpop.f32.mrb[0].mxu0
        %v520 = vadd.f32 0.0, %v519
        %v521 = vpop.f32.mrb[0].mxu0
        %v522 = vpop.f32.mrb[0].mxu0
        %v523 = vadd.f32 0.0, %v522
        %v524 = vpop.f32.mrb[0].mxu0
        %525 = vmatprep.mubr.bf16.mxu0 0
        %526 = vmatmul.mubr.bf16.gmra.mrb[0].mxu0 %v398
        %v527 = vpop.f32.mrb[0].mxu0
        %v528 = vadd.f32 0.0, %v527
        %v529 = vpop.f32.mrb[0].mxu0
        %v530 = vpop.f32.mrb[0].mxu0
        %v531 = vadd.f32 0.0, %v530
        %v532 = vpop.f32.mrb[0].mxu0
        %533 = vmatprep.mubr.bf16.mxu0 0
        %534 = vmatmul.mubr.bf16.gmra.mrb[0].mxu0 %v399
        %v535 = vpop.f32.mrb[0].mxu0
        %v536 = vadd.f32 0.0, %v535
        %v537 = vpop.f32.mrb[0].mxu0
        %v538 = vpop.f32.mrb[0].mxu0
        %v539 = vadd.f32 0.0, %v538
        %v540 = vpop.f32.mrb[0].mxu0
        %541 = vmatprep.mubr.bf16.mxu0 0
        %542 = vmatmul.mubr.bf16.gmra.mrb[0].mxu0 %v400
        %v543 = vpop.f32.mrb[0].mxu0
        %v544 = vadd.f32 0.0, %v543
        %v545 = vpop.f32.mrb[0].mxu0
        %v546 = vpop.f32.mrb[0].mxu0
        %v547 = vadd.f32 0.0, %v546
        %v548 = vpop.f32.mrb[0].mxu0
        %549 = vmatprep.mubr.bf16.mxu0 0
        %550 = vmatmul.mubr.bf16.gmra.mrb[0].mxu0 %v401
        %v551 = vpop.f32.mrb[0].mxu0
        %v552 = vadd.f32 0.0, %v551
        %v553 = vpop.f32.mrb[0].mxu0
        %v554 = vpop.f32.mrb[0].mxu0
        %v555 = vadd.f32 0.0, %v554
        %v556 = vpop.f32.mrb[0].mxu0
        %557 = vmatprep.mubr.bf16.mxu0 0
        %558 = vmatmul.mubr.bf16.gmra.mrb[0].mxu0 %v402
        %v559 = vpop.f32.mrb[0].mxu0
        %v560 = vadd.f32 0.0, %v559
        %v561 = vpop.f32.mrb[0].mxu0
        %v562 = vpop.f32.mrb[0].mxu0
        %v563 = vadd.f32 0.0, %v562
        %v564 = vpop.f32.mrb[0].mxu0
        %565 = vmatprep.mubr.bf16.mxu0 0
        %566 = vmatmul.mubr.bf16.gmra.mrb[0].mxu0 %v403
        %v567 = vpop.f32.mrb[0].mxu0
        %v568 = vadd.f32 0.0, %v567
        %v569 = vpop.f32.mrb[0].mxu0
        %v570 = vpop.f32.mrb[0].mxu0
        %v571 = vadd.f32 0.0, %v570
        %v572 = vpop.f32.mrb[0].mxu0
        %573 = vmatprep.mubr.bf16.mxu0 0
        %574 = vmatmul.mubr.bf16.gmra.mrb[0].mxu0 %v404
        %v575 = vpop.f32.mrb[0].mxu0
        %v576 = vadd.f32 0.0, %v575
        %v577 = vpop.f32.mrb[0].mxu0
        %v578 = vpop.f32.mrb[0].mxu0
        %v579 = vadd.f32 0.0, %v578
        %v580 = vpop.f32.mrb[0].mxu0
        %581 = vdwg.mxu0
        %v582 = vmax.f32 %v504, 0.0
        %v583 = vmax.f32 %v507, 0.0
        %v584 = vmax.f32 %v512, 0.0
        %v585 = vmax.f32 %v515, 0.0
        %v586 = vmax.f32 %v520, 0.0
        %v587 = vmax.f32 %v523, 0.0
        %v588 = vmax.f32 %v528, 0.0
        %v589 = vmax.f32 %v531, 0.0
        %v590 = vmax.f32 %v536, 0.0
        %v591 = vmax.f32 %v539, 0.0
        %v592 = vmax.f32 %v544, 0.0
        %v593 = vmax.f32 %v547, 0.0
        %v594 = vmax.f32 %v552, 0.0
        %v595 = vmax.f32 %v555, 0.0
        %v596 = vmax.f32 %v560, 0.0
        %v597 = vmax.f32 %v563, 0.0
        %v598 = vmax.f32 %v568, 0.0
        %v599 = vmax.f32 %v571, 0.0
        %v600 = vmax.f32 %v576, 0.0
        %v601 = vmax.f32 %v579, 0.0
        %v602 = vmin.f32 %v582, 6.0
        %v603 = vmin.f32 %v583, 6.0
        %v604 = vmin.f32 %v584, 6.0
        %v605 = vmin.f32 %v585, 6.0
        %v606 = vmin.f32 %v586, 6.0
        %v607 = vmin.f32 %v587, 6.0
        %v608 = vmin.f32 %v588, 6.0
        %v609 = vmin.f32 %v589, 6.0
        %v610 = vmin.f32 %v590, 6.0
        %v611 = vmin.f32 %v591, 6.0
        %v612 = vmin.f32 %v592, 6.0
        %v613 = vmin.f32 %v593, 6.0
        %v614 = vmin.f32 %v594, 6.0
        %v615 = vmin.f32 %v595, 6.0
        %v616 = vmin.f32 %v596, 6.0
        %v617 = vmin.f32 %v597, 6.0
        %v618 = vmin.f32 %v598, 6.0
        %v619 = vmin.f32 %v599, 6.0
        %v620 = vmin.f32 %v600, 6.0
        %v621 = vmin.f32 %v601, 6.0
        %vm642 = vcmask 1040384
        %v643 = vrot.slane %v602, 7
        %v644 = vrot.slane %v603, 7
        %v645 = vsel %vm642, %v643, %v644
        %v646 = vrot.slane %v604, 7
        %v647 = vrot.slane %v605, 7
        %v648 = vsel %vm642, %v646, %v647
        %v649 = vrot.slane %v606, 7
        %v650 = vrot.slane %v607, 7
        %v651 = vsel %vm642, %v649, %v650
        %v652 = vrot.slane %v608, 7
        %v653 = vrot.slane %v609, 7
        %v654 = vsel %vm642, %v652, %v653
        %v655 = vrot.slane %v610, 7
        %v656 = vrot.slane %v611, 7
        %v657 = vsel %vm642, %v655, %v656
        %v658 = vrot.slane %v612, 7
        %v659 = vrot.slane %v613, 7
        %v660 = vsel %vm642, %v658, %v659
        %v661 = vrot.slane %v614, 7
        %v662 = vrot.slane %v615, 7
        %v663 = vsel %vm642, %v661, %v662
        %v664 = vrot.slane %v616, 7
        %v665 = vrot.slane %v617, 7
        %v666 = vsel %vm642, %v664, %v665
        %v667 = vrot.slane %v618, 7
        %v668 = vrot.slane %v619, 7
        %v669 = vsel %vm642, %v667, %v668
        %v670 = vrot.slane %v620, 7
        %v671 = vrot.slane %v621, 7
        %v672 = vsel %vm642, %v670, %v671
        %v703 = vsel %vm642, 0.0, %v643
        %v704 = vsel %vm642, 0.0, %v646
        %v705 = vsel %vm642, 0.0, %v649
        %v706 = vsel %vm642, 0.0, %v652
        %v707 = vsel %vm642, 0.0, %v655
        %v708 = vsel %vm642, 0.0, %v658
        %v709 = vsel %vm642, 0.0, %v661
        %v710 = vsel %vm642, 0.0, %v664
        %v711 = vsel %vm642, 0.0, %v667
        %v712 = vsel %vm642, 0.0, %v670
        %v713 = vsel %vm642, %v644, 0.0
        %v714 = vsel %vm642, %v647, 0.0
        %v715 = vsel %vm642, %v650, 0.0
        %v716 = vsel %vm642, %v653, 0.0
        %v717 = vsel %vm642, %v656, 0.0
        %v718 = vsel %vm642, %v659, 0.0
        %v719 = vsel %vm642, %v662, 0.0
        %v720 = vsel %vm642, %v665, 0.0
        %v721 = vsel %vm642, %v668, 0.0
        %v722 = vsel %vm642, %v671, 0.0
        %v723 = vld [vmem:[#allocation7] sm:$0xff]
        %v724 = vld [vmem:[#allocation7 + $0x8] sm:$0x1]
        %v725 = vlaneseq
        %v726 = vshrl.u32 %v725, 7
        %v727 = vsub.s32 0, %v726
        %v728 = vrot.slane %v723, %v727
        %v729 = vmul.f32 %v703, %v728
        %v730 = vmul.f32 %v645, %v728
        %v731 = vmul.f32 %v704, %v728
        %v732 = vmul.f32 %v648, %v728
        %v733 = vmul.f32 %v705, %v728
        %v734 = vmul.f32 %v651, %v728
        %v735 = vmul.f32 %v706, %v728
        %v736 = vmul.f32 %v654, %v728
        %v737 = vmul.f32 %v707, %v728
        %v738 = vmul.f32 %v657, %v728
        %v739 = vmul.f32 %v708, %v728
        %v740 = vmul.f32 %v660, %v728
        %v741 = vmul.f32 %v709, %v728
        %v742 = vmul.f32 %v663, %v728
        %v743 = vmul.f32 %v710, %v728
        %v744 = vmul.f32 %v666, %v728
        %v745 = vadd.f32 %v729, 0.0
        %v746 = vadd.f32 %v730, 0.0
        %v747 = vadd.f32 %v731, 0.0
        %v748 = vadd.f32 %v732, 0.0
        %v749 = vadd.f32 %v733, 0.0
        %v750 = vadd.f32 %v734, 0.0
        %v751 = vadd.f32 %v735, 0.0
        %v752 = vadd.f32 %v736, 0.0
        %v753 = vadd.f32 %v737, 0.0
        %v754 = vadd.f32 %v738, 0.0
        %v755 = vadd.f32 %v739, 0.0
        %v756 = vadd.f32 %v740, 0.0
        %v757 = vadd.f32 %v741, 0.0
        %v758 = vadd.f32 %v742, 0.0
        %v759 = vadd.f32 %v743, 0.0
        %v760 = vadd.f32 %v744, 0.0
        %v761 = vlaneseq
        %v762 = vshrl.u32 %v761, 7
        %v763 = vsub.s32 1, %v762
        %v764 = vrot.slane %v723, %v763
        %v765 = vmul.f32 %v703, %v764
        %v766 = vmul.f32 %v645, %v764
        %v767 = vmul.f32 %v713, %v764
        %v768 = vmul.f32 %v704, %v764
        %v769 = vmul.f32 %v648, %v764
        %v770 = vmul.f32 %v714, %v764
        %v771 = vmul.f32 %v705, %v764
        %v772 = vmul.f32 %v651, %v764
        %v773 = vmul.f32 %v715, %v764
        %v774 = vmul.f32 %v706, %v764
        %v775 = vmul.f32 %v654, %v764
        %v776 = vmul.f32 %v716, %v764
        %v777 = vmul.f32 %v707, %v764
        %v778 = vmul.f32 %v657, %v764
        %v779 = vmul.f32 %v717, %v764
        %v780 = vmul.f32 %v708, %v764
        %v781 = vmul.f32 %v660, %v764
        %v782 = vmul.f32 %v718, %v764
        %v783 = vmul.f32 %v709, %v764
        %v784 = vmul.f32 %v663, %v764
        %v785 = vmul.f32 %v719, %v764
        %v786 = vmul.f32 %v710, %v764
        %v787 = vmul.f32 %v666, %v764
        %v788 = vmul.f32 %v720, %v764
        %vm813 = vcmask 1046528
        %v814 = vrot.slane %v765, 1
        %v815 = vrot.slane %v766, 1
        %v816 = vsel %vm813, %v814, %v815
        %v817 = vrot.slane %v767, 1
        %v818 = vsel %vm813, %v815, %v817
        %v819 = vrot.slane %v768, 1
        %v820 = vrot.slane %v769, 1
        %v821 = vsel %vm813, %v819, %v820
        %v822 = vrot.slane %v770, 1
        %v823 = vsel %vm813, %v820, %v822
        %v824 = vrot.slane %v771, 1
        %v825 = vrot.slane %v772, 1
        %v826 = vsel %vm813, %v824, %v825
        %v827 = vrot.slane %v773, 1
        %v828 = vsel %vm813, %v825, %v827
        %v829 = vrot.slane %v774, 1
        %v830 = vrot.slane %v775, 1
        %v831 = vsel %vm813, %v829, %v830
        %v832 = vrot.slane %v776, 1
        %v833 = vsel %vm813, %v830, %v832
        %v834 = vrot.slane %v777, 1
        %v835 = vrot.slane %v778, 1
        %v836 = vsel %vm813, %v834, %v835
        %v837 = vrot.slane %v779, 1
        %v838 = vsel %vm813, %v835, %v837
        %v839 = vrot.slane %v780, 1
        %v840 = vrot.slane %v781, 1
        %v841 = vsel %vm813, %v839, %v840
        %v842 = vrot.slane %v782, 1
        %v843 = vsel %vm813, %v840, %v842
        %v844 = vrot.slane %v783, 1
        %v845 = vrot.slane %v784, 1
        %v846 = vsel %vm813, %v844, %v845
        %v847 = vrot.slane %v785, 1
        %v848 = vsel %vm813, %v845, %v847
        %v849 = vrot.slane %v786, 1
        %v850 = vrot.slane %v787, 1
        %v851 = vsel %vm813, %v849, %v850
        %v852 = vrot.slane %v788, 1
        %v853 = vsel %vm813, %v850, %v852
        %v870 = vadd.f32 %v745, %v816
        %v871 = vadd.f32 %v746, %v818
        %v872 = vadd.f32 %v747, %v821
        %v873 = vadd.f32 %v748, %v823
        %v874 = vadd.f32 %v749, %v826
        %v875 = vadd.f32 %v750, %v828
        %v876 = vadd.f32 %v751, %v831
        %v877 = vadd.f32 %v752, %v833
        %v878 = vadd.f32 %v753, %v836
        %v879 = vadd.f32 %v754, %v838
        %v880 = vadd.f32 %v755, %v841
        %v881 = vadd.f32 %v756, %v843
        %v882 = vadd.f32 %v757, %v846
        %v883 = vadd.f32 %v758, %v848
        %v884 = vadd.f32 %v759, %v851
        %v885 = vadd.f32 %v760, %v853
        %v886 = vlaneseq
        %v887 = vshrl.u32 %v886, 7
        %v888 = vsub.s32 2, %v887
        %v889 = vrot.slane %v723, %v888
        %v890 = vmul.f32 %v703, %v889
        %v891 = vmul.f32 %v645, %v889
        %v892 = vmul.f32 %v713, %v889
        %v893 = vmul.f32 %v704, %v889
        %v894 = vmul.f32 %v648, %v889
        %v895 = vmul.f32 %v714, %v889
        %v896 = vmul.f32 %v705, %v889
        %v897 = vmul.f32 %v651, %v889
        %v898 = vmul.f32 %v715, %v889
        %v899 = vmul.f32 %v706, %v889
        %v900 = vmul.f32 %v654, %v889
        %v901 = vmul.f32 %v716, %v889
        %v902 = vmul.f32 %v707, %v889
        %v903 = vmul.f32 %v657, %v889
        %v904 = vmul.f32 %v717, %v889
        %v905 = vmul.f32 %v708, %v889
        %v906 = vmul.f32 %v660, %v889
        %v907 = vmul.f32 %v718, %v889
        %v908 = vmul.f32 %v709, %v889
        %v909 = vmul.f32 %v663, %v889
        %v910 = vmul.f32 %v719, %v889
        %v911 = vmul.f32 %v710, %v889
        %v912 = vmul.f32 %v666, %v889
        %v913 = vmul.f32 %v720, %v889
        %vm938 = vcmask 1045504
        %v939 = vrot.slane %v890, 2
        %v940 = vrot.slane %v891, 2
        %v941 = vsel %vm938, %v939, %v940
        %v942 = vrot.slane %v892, 2
        %v943 = vsel %vm938, %v940, %v942
        %v944 = vrot.slane %v893, 2
        %v945 = vrot.slane %v894, 2
        %v946 = vsel %vm938, %v944, %v945
        %v947 = vrot.slane %v895, 2
        %v948 = vsel %vm938, %v945, %v947
        %v949 = vrot.slane %v896, 2
        %v950 = vrot.slane %v897, 2
        %v951 = vsel %vm938, %v949, %v950
        %v952 = vrot.slane %v898, 2
        %v953 = vsel %vm938, %v950, %v952
        %v954 = vrot.slane %v899, 2
        %v955 = vrot.slane %v900, 2
        %v956 = vsel %vm938, %v954, %v955
        %v957 = vrot.slane %v901, 2
        %v958 = vsel %vm938, %v955, %v957
        %v959 = vrot.slane %v902, 2
        %v960 = vrot.slane %v903, 2
        %v961 = vsel %vm938, %v959, %v960
        %v962 = vrot.slane %v904, 2
        %v963 = vsel %vm938, %v960, %v962
        %v964 = vrot.slane %v905, 2
        %v965 = vrot.slane %v906, 2
        %v966 = vsel %vm938, %v964, %v965
        %v967 = vrot.slane %v907, 2
        %v968 = vsel %vm938, %v965, %v967
        %v969 = vrot.slane %v908, 2
        %v970 = vrot.slane %v909, 2
        %v971 = vsel %vm938, %v969, %v970
        %v972 = vrot.slane %v910, 2
        %v973 = vsel %vm938, %v970, %v972
        %v974 = vrot.slane %v911, 2
        %v975 = vrot.slane %v912, 2
        %v976 = vsel %vm938, %v974, %v975
        %v977 = vrot.slane %v913, 2
        %v978 = vsel %vm938, %v975, %v977
        %v995 = vadd.f32 %v870, %v941
        %v996 = vadd.f32 %v871, %v943
        %v997 = vadd.f32 %v872, %v946
        %v998 = vadd.f32 %v873, %v948
        %v999 = vadd.f32 %v874, %v951
        %v1000 = vadd.f32 %v875, %v953
        %v1001 = vadd.f32 %v876, %v956
        %v1002 = vadd.f32 %v877, %v958
        %v1003 = vadd.f32 %v878, %v961
        %v1004 = vadd.f32 %v879, %v963
        %v1005 = vadd.f32 %v880, %v966
        %v1006 = vadd.f32 %v881, %v968
        %v1007 = vadd.f32 %v882, %v971
        %v1008 = vadd.f32 %v883, %v973
        %v1009 = vadd.f32 %v884, %v976
        %v1010 = vadd.f32 %v885, %v978
        %v1011 = vlaneseq
        %v1012 = vshrl.u32 %v1011, 7
        %v1013 = vsub.s32 3, %v1012
        %v1014 = vrot.slane %v723, %v1013
        %v1015 = vmul.f32 %v704, %v1014
        %v1016 = vmul.f32 %v648, %v1014
        %v1017 = vmul.f32 %v705, %v1014
        %v1018 = vmul.f32 %v651, %v1014
        %v1019 = vmul.f32 %v706, %v1014
        %v1020 = vmul.f32 %v654, %v1014
        %v1021 = vmul.f32 %v707, %v1014
        %v1022 = vmul.f32 %v657, %v1014
        %v1023 = vmul.f32 %v708, %v1014
        %v1024 = vmul.f32 %v660, %v1014
        %v1025 = vmul.f32 %v709, %v1014
        %v1026 = vmul.f32 %v663, %v1014
        %v1027 = vmul.f32 %v710, %v1014
        %v1028 = vmul.f32 %v666, %v1014
        %v1029 = vmul.f32 %v711, %v1014
        %v1030 = vmul.f32 %v669, %v1014
        %v1031 = vadd.f32 %v995, %v1015
        %v1032 = vadd.f32 %v996, %v1016
        %v1033 = vadd.f32 %v997, %v1017
        %v1034 = vadd.f32 %v998, %v1018
        %v1035 = vadd.f32 %v999, %v1019
        %v1036 = vadd.f32 %v1000, %v1020
        %v1037 = vadd.f32 %v1001, %v1021
        %v1038 = vadd.f32 %v1002, %v1022
        %v1039 = vadd.f32 %v1003, %v1023
        %v1040 = vadd.f32 %v1004, %v1024
        %v1041 = vadd.f32 %v1005, %v1025
        %v1042 = vadd.f32 %v1006, %v1026
        %v1043 = vadd.f32 %v1007, %v1027
        %v1044 = vadd.f32 %v1008, %v1028
        %v1045 = vadd.f32 %v1009, %v1029
        %v1046 = vadd.f32 %v1010, %v1030
        %v1047 = vlaneseq
        %v1048 = vshrl.u32 %v1047, 7
        %v1049 = vsub.s32 4, %v1048
        %v1050 = vrot.slane %v723, %v1049
        %v1051 = vmul.f32 %v704, %v1050
        %v1052 = vmul.f32 %v648, %v1050
        %v1053 = vmul.f32 %v714, %v1050
        %v1054 = vmul.f32 %v705, %v1050
        %v1055 = vmul.f32 %v651, %v1050
        %v1056 = vmul.f32 %v715, %v1050
        %v1057 = vmul.f32 %v706, %v1050
        %v1058 = vmul.f32 %v654, %v1050
        %v1059 = vmul.f32 %v716, %v1050
        %v1060 = vmul.f32 %v707, %v1050
        %v1061 = vmul.f32 %v657, %v1050
        %v1062 = vmul.f32 %v717, %v1050
        %v1063 = vmul.f32 %v708, %v1050
        %v1064 = vmul.f32 %v660, %v1050
        %v1065 = vmul.f32 %v718, %v1050
        %v1066 = vmul.f32 %v709, %v1050
        %v1067 = vmul.f32 %v663, %v1050
        %v1068 = vmul.f32 %v719, %v1050
        %v1069 = vmul.f32 %v710, %v1050
        %v1070 = vmul.f32 %v666, %v1050
        %v1071 = vmul.f32 %v720, %v1050
        %v1072 = vmul.f32 %v711, %v1050
        %v1073 = vmul.f32 %v669, %v1050
        %v1074 = vmul.f32 %v721, %v1050
        %v1099 = vrot.slane %v1051, 1
        %v1100 = vrot.slane %v1052, 1
        %v1101 = vsel %vm813, %v1099, %v1100
        %v1102 = vrot.slane %v1053, 1
        %v1103 = vsel %vm813, %v1100, %v1102
        %v1104 = vrot.slane %v1054, 1
        %v1105 = vrot.slane %v1055, 1
        %v1106 = vsel %vm813, %v1104, %v1105
        %v1107 = vrot.slane %v1056, 1
        %v1108 = vsel %vm813, %v1105, %v1107
        %v1109 = vrot.slane %v1057, 1
        %v1110 = vrot.slane %v1058, 1
        %v1111 = vsel %vm813, %v1109, %v1110
        %v1112 = vrot.slane %v1059, 1
        %v1113 = vsel %vm813, %v1110, %v1112
        %v1114 = vrot.slane %v1060, 1
        %v1115 = vrot.slane %v1061, 1
        %v1116 = vsel %vm813, %v1114, %v1115
        %v1117 = vrot.slane %v1062, 1
        %v1118 = vsel %vm813, %v1115, %v1117
        %v1119 = vrot.slane %v1063, 1
        %v1120 = vrot.slane %v1064, 1
        %v1121 = vsel %vm813, %v1119, %v1120
        %v1122 = vrot.slane %v1065, 1
        %v1123 = vsel %vm813, %v1120, %v1122
        %v1124 = vrot.slane %v1066, 1
        %v1125 = vrot.slane %v1067, 1
        %v1126 = vsel %vm813, %v1124, %v1125
        %v1127 = vrot.slane %v1068, 1
        %v1128 = vsel %vm813, %v1125, %v1127
        %v1129 = vrot.slane %v1069, 1
        %v1130 = vrot.slane %v1070, 1
        %v1131 = vsel %vm813, %v1129, %v1130
        %v1132 = vrot.slane %v1071, 1
        %v1133 = vsel %vm813, %v1130, %v1132
        %v1134 = vrot.slane %v1072, 1
        %v1135 = vrot.slane %v1073, 1
        %v1136 = vsel %vm813, %v1134, %v1135
        %v1137 = vrot.slane %v1074, 1
        %v1138 = vsel %vm813, %v1135, %v1137
        %v1155 = vadd.f32 %v1031, %v1101
        %v1156 = vadd.f32 %v1032, %v1103
        %v1157 = vadd.f32 %v1033, %v1106
        %v1158 = vadd.f32 %v1034, %v1108
        %v1159 = vadd.f32 %v1035, %v1111
        %v1160 = vadd.f32 %v1036, %v1113
        %v1161 = vadd.f32 %v1037, %v1116
        %v1162 = vadd.f32 %v1038, %v1118
        %v1163 = vadd.f32 %v1039, %v1121
        %v1164 = vadd.f32 %v1040, %v1123
        %v1165 = vadd.f32 %v1041, %v1126
        %v1166 = vadd.f32 %v1042, %v1128
        %v1167 = vadd.f32 %v1043, %v1131
        %v1168 = vadd.f32 %v1044, %v1133
        %v1169 = vadd.f32 %v1045, %v1136
        %v1170 = vadd.f32 %v1046, %v1138
        %v1171 = vlaneseq
        %v1172 = vshrl.u32 %v1171, 7
        %v1173 = vsub.s32 5, %v1172
        %v1174 = vrot.slane %v723, %v1173
        %v1175 = vmul.f32 %v704, %v1174
        %v1176 = vmul.f32 %v648, %v1174
        %v1177 = vmul.f32 %v714, %v1174
        %v1178 = vmul.f32 %v705, %v1174
        %v1179 = vmul.f32 %v651, %v1174
        %v1180 = vmul.f32 %v715, %v1174
        %v1181 = vmul.f32 %v706, %v1174
        %v1182 = vmul.f32 %v654, %v1174
        %v1183 = vmul.f32 %v716, %v1174
        %v1184 = vmul.f32 %v707, %v1174
        %v1185 = vmul.f32 %v657, %v1174
        %v1186 = vmul.f32 %v717, %v1174
        %v1187 = vmul.f32 %v708, %v1174
        %v1188 = vmul.f32 %v660, %v1174
        %v1189 = vmul.f32 %v718, %v1174
        %v1190 = vmul.f32 %v709, %v1174
        %v1191 = vmul.f32 %v663, %v1174
        %v1192 = vmul.f32 %v719, %v1174
        %v1193 = vmul.f32 %v710, %v1174
        %v1194 = vmul.f32 %v666, %v1174
        %v1195 = vmul.f32 %v720, %v1174
        %v1196 = vmul.f32 %v711, %v1174
        %v1197 = vmul.f32 %v669, %v1174
        %v1198 = vmul.f32 %v721, %v1174
        %v1223 = vrot.slane %v1175, 2
        %v1224 = vrot.slane %v1176, 2
        %v1225 = vsel %vm938, %v1223, %v1224
        %v1226 = vrot.slane %v1177, 2
        %v1227 = vsel %vm938, %v1224, %v1226
        %v1228 = vrot.slane %v1178, 2
        %v1229 = vrot.slane %v1179, 2
        %v1230 = vsel %vm938, %v1228, %v1229
        %v1231 = vrot.slane %v1180, 2
        %v1232 = vsel %vm938, %v1229, %v1231
        %v1233 = vrot.slane %v1181, 2
        %v1234 = vrot.slane %v1182, 2
        %v1235 = vsel %vm938, %v1233, %v1234
        %v1236 = vrot.slane %v1183, 2
        %v1237 = vsel %vm938, %v1234, %v1236
        %v1238 = vrot.slane %v1184, 2
        %v1239 = vrot.slane %v1185, 2
        %v1240 = vsel %vm938, %v1238, %v1239
        %v1241 = vrot.slane %v1186, 2
        %v1242 = vsel %vm938, %v1239, %v1241
        %v1243 = vrot.slane %v1187, 2
        %v1244 = vrot.slane %v1188, 2
        %v1245 = vsel %vm938, %v1243, %v1244
        %v1246 = vrot.slane %v1189, 2
        %v1247 = vsel %vm938, %v1244, %v1246
        %v1248 = vrot.slane %v1190, 2
        %v1249 = vrot.slane %v1191, 2
        %v1250 = vsel %vm938, %v1248, %v1249
        %v1251 = vrot.slane %v1192, 2
        %v1252 = vsel %vm938, %v1249, %v1251
        %v1253 = vrot.slane %v1193, 2
        %v1254 = vrot.slane %v1194, 2
        %v1255 = vsel %vm938, %v1253, %v1254
        %v1256 = vrot.slane %v1195, 2
        %v1257 = vsel %vm938, %v1254, %v1256
        %v1258 = vrot.slane %v1196, 2
        %v1259 = vrot.slane %v1197, 2
        %v1260 = vsel %vm938, %v1258, %v1259
        %v1261 = vrot.slane %v1198, 2
        %v1262 = vsel %vm938, %v1259, %v1261
        %v1279 = vadd.f32 %v1155, %v1225
        %v1280 = vadd.f32 %v1156, %v1227
        %v1281 = vadd.f32 %v1157, %v1230
        %v1282 = vadd.f32 %v1158, %v1232
        %v1283 = vadd.f32 %v1159, %v1235
        %v1284 = vadd.f32 %v1160, %v1237
        %v1285 = vadd.f32 %v1161, %v1240
        %v1286 = vadd.f32 %v1162, %v1242
        %v1287 = vadd.f32 %v1163, %v1245
        %v1288 = vadd.f32 %v1164, %v1247
        %v1289 = vadd.f32 %v1165, %v1250
        %v1290 = vadd.f32 %v1166, %v1252
        %v1291 = vadd.f32 %v1167, %v1255
        %v1292 = vadd.f32 %v1168, %v1257
        %v1293 = vadd.f32 %v1169, %v1260
        %v1294 = vadd.f32 %v1170, %v1262
        %v1295 = vlaneseq
        %v1296 = vshrl.u32 %v1295, 7
        %v1297 = vsub.s32 6, %v1296
        %v1298 = vrot.slane %v723, %v1297
        %v1299 = vmul.f32 %v705, %v1298
        %v1300 = vmul.f32 %v651, %v1298
        %v1301 = vmul.f32 %v706, %v1298
        %v1302 = vmul.f32 %v654, %v1298
        %v1303 = vmul.f32 %v707, %v1298
        %v1304 = vmul.f32 %v657, %v1298
        %v1305 = vmul.f32 %v708, %v1298
        %v1306 = vmul.f32 %v660, %v1298
        %v1307 = vmul.f32 %v709, %v1298
        %v1308 = vmul.f32 %v663, %v1298
        %v1309 = vmul.f32 %v710, %v1298
        %v1310 = vmul.f32 %v666, %v1298
        %v1311 = vmul.f32 %v711, %v1298
        %v1312 = vmul.f32 %v669, %v1298
        %v1313 = vmul.f32 %v712, %v1298
        %v1314 = vmul.f32 %v672, %v1298
        %v1315 = vadd.f32 %v1279, %v1299
        %v1316 = vadd.f32 %v1280, %v1300
        %v1317 = vadd.f32 %v1281, %v1301
        %v1318 = vadd.f32 %v1282, %v1302
        %v1319 = vadd.f32 %v1283, %v1303
        %v1320 = vadd.f32 %v1284, %v1304
        %v1321 = vadd.f32 %v1285, %v1305
        %v1322 = vadd.f32 %v1286, %v1306
        %v1323 = vadd.f32 %v1287, %v1307
        %v1324 = vadd.f32 %v1288, %v1308
        %v1325 = vadd.f32 %v1289, %v1309
        %v1326 = vadd.f32 %v1290, %v1310
        %v1327 = vadd.f32 %v1291, %v1311
        %v1328 = vadd.f32 %v1292, %v1312
        %v1329 = vadd.f32 %v1293, %v1313
        %v1330 = vadd.f32 %v1294, %v1314
        %v1331 = vlaneseq
        %v1332 = vshrl.u32 %v1331, 7
        %v1333 = vsub.s32 7, %v1332
        %v1334 = vrot.slane %v723, %v1333
        %v1335 = vmul.f32 %v705, %v1334
        %v1336 = vmul.f32 %v651, %v1334
        %v1337 = vmul.f32 %v715, %v1334
        %v1338 = vmul.f32 %v706, %v1334
        %v1339 = vmul.f32 %v654, %v1334
        %v1340 = vmul.f32 %v716, %v1334
        %v1341 = vmul.f32 %v707, %v1334
        %v1342 = vmul.f32 %v657, %v1334
        %v1343 = vmul.f32 %v717, %v1334
        %v1344 = vmul.f32 %v708, %v1334
        %v1345 = vmul.f32 %v660, %v1334
        %v1346 = vmul.f32 %v718, %v1334
        %v1347 = vmul.f32 %v709, %v1334
        %v1348 = vmul.f32 %v663, %v1334
        %v1349 = vmul.f32 %v719, %v1334
        %v1350 = vmul.f32 %v710, %v1334
        %v1351 = vmul.f32 %v666, %v1334
        %v1352 = vmul.f32 %v720, %v1334
        %v1353 = vmul.f32 %v711, %v1334
        %v1354 = vmul.f32 %v669, %v1334
        %v1355 = vmul.f32 %v721, %v1334
        %v1356 = vmul.f32 %v712, %v1334
        %v1357 = vmul.f32 %v672, %v1334
        %v1358 = vmul.f32 %v722, %v1334
        %v1383 = vrot.slane %v1335, 1
        %v1384 = vrot.slane %v1336, 1
        %v1385 = vsel %vm813, %v1383, %v1384
        %v1386 = vrot.slane %v1337, 1
        %v1387 = vsel %vm813, %v1384, %v1386
        %v1388 = vrot.slane %v1338, 1
        %v1389 = vrot.slane %v1339, 1
        %v1390 = vsel %vm813, %v1388, %v1389
        %v1391 = vrot.slane %v1340, 1
        %v1392 = vsel %vm813, %v1389, %v1391
        %v1393 = vrot.slane %v1341, 1
        %v1394 = vrot.slane %v1342, 1
        %v1395 = vsel %vm813, %v1393, %v1394
        %v1396 = vrot.slane %v1343, 1
        %v1397 = vsel %vm813, %v1394, %v1396
        %v1398 = vrot.slane %v1344, 1
        %v1399 = vrot.slane %v1345, 1
        %v1400 = vsel %vm813, %v1398, %v1399
        %v1401 = vrot.slane %v1346, 1
        %v1402 = vsel %vm813, %v1399, %v1401
        %v1403 = vrot.slane %v1347, 1
        %v1404 = vrot.slane %v1348, 1
        %v1405 = vsel %vm813, %v1403, %v1404
        %v1406 = vrot.slane %v1349, 1
        %v1407 = vsel %vm813, %v1404, %v1406
        %v1408 = vrot.slane %v1350, 1
        %v1409 = vrot.slane %v1351, 1
        %v1410 = vsel %vm813, %v1408, %v1409
        %v1411 = vrot.slane %v1352, 1
        %v1412 = vsel %vm813, %v1409, %v1411
        %v1413 = vrot.slane %v1353, 1
        %v1414 = vrot.slane %v1354, 1
        %v1415 = vsel %vm813, %v1413, %v1414
        %v1416 = vrot.slane %v1355, 1
        %v1417 = vsel %vm813, %v1414, %v1416
        %v1418 = vrot.slane %v1356, 1
        %v1419 = vrot.slane %v1357, 1
        %v1420 = vsel %vm813, %v1418, %v1419
        %v1421 = vrot.slane %v1358, 1
        %v1422 = vsel %vm813, %v1419, %v1421
        %v1439 = vadd.f32 %v1315, %v1385
        %v1440 = vadd.f32 %v1316, %v1387
        %v1441 = vadd.f32 %v1317, %v1390
        %v1442 = vadd.f32 %v1318, %v1392
        %v1443 = vadd.f32 %v1319, %v1395
        %v1444 = vadd.f32 %v1320, %v1397
        %v1445 = vadd.f32 %v1321, %v1400
        %v1446 = vadd.f32 %v1322, %v1402
        %v1447 = vadd.f32 %v1323, %v1405
        %v1448 = vadd.f32 %v1324, %v1407
        %v1449 = vadd.f32 %v1325, %v1410
        %v1450 = vadd.f32 %v1326, %v1412
        %v1451 = vadd.f32 %v1327, %v1415
        %v1452 = vadd.f32 %v1328, %v1417
        %v1453 = vadd.f32 %v1329, %v1420
        %v1454 = vadd.f32 %v1330, %v1422
        %v1455 = vlaneseq
        %v1456 = vshrl.u32 %v1455, 7
        %v1457 = vsub.s32 0, %v1456
        %v1458 = vrot.slane %v724, %v1457
        %v1459 = vmul.f32 %v705, %v1458
        %v1460 = vmul.f32 %v651, %v1458
        %v1461 = vmul.f32 %v715, %v1458
        %v1462 = vmul.f32 %v706, %v1458
        %v1463 = vmul.f32 %v654, %v1458
        %v1464 = vmul.f32 %v716, %v1458
        %v1465 = vmul.f32 %v707, %v1458
        %v1466 = vmul.f32 %v657, %v1458
        %v1467 = vmul.f32 %v717, %v1458
        %v1468 = vmul.f32 %v708, %v1458
        %v1469 = vmul.f32 %v660, %v1458
        %v1470 = vmul.f32 %v718, %v1458
        %v1471 = vmul.f32 %v709, %v1458
        %v1472 = vmul.f32 %v663, %v1458
        %v1473 = vmul.f32 %v719, %v1458
        %v1474 = vmul.f32 %v710, %v1458
        %v1475 = vmul.f32 %v666, %v1458
        %v1476 = vmul.f32 %v720, %v1458
        %v1477 = vmul.f32 %v711, %v1458
        %v1478 = vmul.f32 %v669, %v1458
        %v1479 = vmul.f32 %v721, %v1458
        %v1480 = vmul.f32 %v712, %v1458
        %v1481 = vmul.f32 %v672, %v1458
        %v1482 = vmul.f32 %v722, %v1458
        %v1507 = vrot.slane %v1459, 2
        %v1508 = vrot.slane %v1460, 2
        %v1509 = vsel %vm938, %v1507, %v1508
        %v1510 = vrot.slane %v1461, 2
        %v1511 = vsel %vm938, %v1508, %v1510
        %v1512 = vrot.slane %v1462, 2
        %v1513 = vrot.slane %v1463, 2
        %v1514 = vsel %vm938, %v1512, %v1513
        %v1515 = vrot.slane %v1464, 2
        %v1516 = vsel %vm938, %v1513, %v1515
        %v1517 = vrot.slane %v1465, 2
        %v1518 = vrot.slane %v1466, 2
        %v1519 = vsel %vm938, %v1517, %v1518
        %v1520 = vrot.slane %v1467, 2
        %v1521 = vsel %vm938, %v1518, %v1520
        %v1522 = vrot.slane %v1468, 2
        %v1523 = vrot.slane %v1469, 2
        %v1524 = vsel %vm938, %v1522, %v1523
        %v1525 = vrot.slane %v1470, 2
        %v1526 = vsel %vm938, %v1523, %v1525
        %v1527 = vrot.slane %v1471, 2
        %v1528 = vrot.slane %v1472, 2
        %v1529 = vsel %vm938, %v1527, %v1528
        %v1530 = vrot.slane %v1473, 2
        %v1531 = vsel %vm938, %v1528, %v1530
        %v1532 = vrot.slane %v1474, 2
        %v1533 = vrot.slane %v1475, 2
        %v1534 = vsel %vm938, %v1532, %v1533
        %v1535 = vrot.slane %v1476, 2
        %v1536 = vsel %vm938, %v1533, %v1535
        %v1537 = vrot.slane %v1477, 2
        %v1538 = vrot.slane %v1478, 2
        %v1539 = vsel %vm938, %v1537, %v1538
        %v1540 = vrot.slane %v1479, 2
        %v1541 = vsel %vm938, %v1538, %v1540
        %v1542 = vrot.slane %v1480, 2
        %v1543 = vrot.slane %v1481, 2
        %v1544 = vsel %vm938, %v1542, %v1543
        %v1545 = vrot.slane %v1482, 2
        %v1546 = vsel %vm938, %v1543, %v1545
        %v1563 = vadd.f32 %v1439, %v1509
        %v1564 = vadd.f32 %v1440, %v1511
        %v1565 = vadd.f32 %v1441, %v1514
        %v1566 = vadd.f32 %v1442, %v1516
        %v1567 = vadd.f32 %v1443, %v1519
        %v1568 = vadd.f32 %v1444, %v1521
        %v1569 = vadd.f32 %v1445, %v1524
        %v1570 = vadd.f32 %v1446, %v1526
        %v1571 = vadd.f32 %v1447, %v1529
        %v1572 = vadd.f32 %v1448, %v1531
        %v1573 = vadd.f32 %v1449, %v1534
        %v1574 = vadd.f32 %v1450, %v1536
        %v1575 = vadd.f32 %v1451, %v1539
        %v1576 = vadd.f32 %v1452, %v1541
        %v1577 = vadd.f32 %v1453, %v1544
        %v1578 = vadd.f32 %v1454, %v1546
        %v1579 = vpack.c.bf16 %v1564, %v1563
        %v1580 = vpack.c.bf16 %v1566, %v1565
        %v1581 = vpack.c.bf16 %v1568, %v1567
        %v1582 = vpack.c.bf16 %v1570, %v1569
        %v1583 = vpack.c.bf16 %v1572, %v1571
        %v1584 = vpack.c.bf16 %v1574, %v1573
        %v1585 = vpack.c.bf16 %v1576, %v1575
        %v1586 = vpack.c.bf16 %v1578, %v1577
        %v1587 = vld [vmem:[#allocation8] sm:$0xf]
        %v1588 = vld [vmem:[#allocation8 + $0x4] sm:$0xf]
        %v1589 = vld [vmem:[#allocation8 + $0x8] sm:$0xf]
        %v1590 = vld [vmem:[#allocation8 + $0xc] sm:$0xf]
        %v1591 = vld [vmem:[#allocation8 + $0x10] sm:$0xf]
        %v1592 = vld [vmem:[#allocation8 + $0x14] sm:$0xf]
        %v1593 = vld [vmem:[#allocation8 + $0x18] sm:$0xf]
        %v1594 = vld [vmem:[#allocation8 + $0x1c] sm:$0xf]
        %v1595 = vld [vmem:[#allocation8 + $0x20] sm:$0xf]
        %v1596 = vld [vmem:[#allocation8 + $0x24] sm:$0xf]
        %v1597 = vld [vmem:[#allocation8 + $0x28] sm:$0xf]
        %v1598 = vld [vmem:[#allocation8 + $0x2c] sm:$0xf]
        %v1599 = vld [vmem:[#allocation8 + $0x30] sm:$0xf]
        %v1600 = vld [vmem:[#allocation8 + $0x34] sm:$0xf]
        %v1601 = vld [vmem:[#allocation8 + $0x38] sm:$0xf]
        %v1602 = vld [vmem:[#allocation8 + $0x3c] sm:$0xf]
        %v1603 = vld [vmem:[%s4] sm:$0x1]
        %v1605 = vlaneseq
        %v1606 = vshrl.u32 %v1605, 7
        %v1607 = vsub.s32 0, %v1606
        %v1608 = vrot.slane %v1603, %v1607
        %v1626 = vunpack.c.l.b16 %v1587
        %v1627 = vunpack.c.l.b16 %v1588
        %v1628 = vunpack.c.l.b16 %v1589
        %v1629 = vunpack.c.l.b16 %v1590
        %v1630 = vunpack.c.l.b16 %v1591
        %v1631 = vunpack.c.l.b16 %v1592
        %v1632 = vunpack.c.l.b16 %v1593
        %v1633 = vunpack.c.l.b16 %v1594
        %v1634 = vunpack.c.l.b16 %v1595
        %v1635 = vunpack.c.l.b16 %v1596
        %v1636 = vunpack.c.l.b16 %v1597
        %v1637 = vunpack.c.l.b16 %v1598
        %v1638 = vunpack.c.l.b16 %v1599
        %v1639 = vunpack.c.l.b16 %v1600
        %v1640 = vunpack.c.l.b16 %v1601
        %v1641 = vunpack.c.l.b16 %v1602
        %v1642 = vpack.c.b16 %v1627, %v1626
        %v1643 = vpack.c.b16 %v1629, %v1628
        %v1644 = vpack.c.b16 %v1631, %v1630
        %v1645 = vpack.c.b16 %v1633, %v1632
        %v1646 = vpack.c.b16 %v1635, %v1634
        %v1647 = vpack.c.b16 %v1637, %v1636
        %v1648 = vpack.c.b16 %v1639, %v1638
        %v1649 = vpack.c.b16 %v1641, %v1640
        %1658 = vmatprep.subr.bf16.mxu0 0
        %1659 = vmatpush1.bf16.msra.mxu0 %v1642
        %1660 = vmatprep.subr.bf16.mxu0 0
        %1661 = vmatpush1.bf16.msra.mxu0 %v1643
        %1662 = vmatprep.subr.bf16.mxu0 0
        %1663 = vmatpush1.bf16.msra.mxu0 %v1644
        %1664 = vmatprep.subr.bf16.mxu0 0
        %1665 = vmatpush1.bf16.msra.mxu0 %v1645
        %1666 = vmatprep.subr.bf16.mxu0 0
        %1667 = vmatpush1.bf16.msra.mxu0 %v1646
        %1668 = vmatprep.subr.bf16.mxu0 0
        %1669 = vmatpush1.bf16.msra.mxu0 %v1647
        %1670 = vmatprep.subr.bf16.mxu0 0
        %1671 = vmatpush1.bf16.msra.mxu0 %v1648
        %1672 = vmatprep.subr.bf16.mxu0 0
        %1673 = vmatpush1.bf16.msra.mxu0 %v1649
        %1674 = vmatprep.subr.bf16.mxu0 0
        %1675 = vmatpush1.bf16.msra.mxu0 0
        %1676 = vmatprep.subr.bf16.mxu0 0
        %1677 = vmatpush1.bf16.msra.mxu0 0
        %1678 = vmatprep.subr.bf16.mxu0 0
        %1679 = vmatpush1.bf16.msra.mxu0 0
        %1680 = vmatprep.subr.bf16.mxu0 0
        %1681 = vmatpush1.bf16.msra.mxu0 0
        %1682 = vmatprep.subr.bf16.mxu0 0
        %1683 = vmatpush1.bf16.msra.mxu0 0
        %1684 = vmatprep.subr.bf16.mxu0 0
        %1685 = vmatpush1.bf16.msra.mxu0 0
        %1686 = vmatprep.subr.bf16.mxu0 0
        %1687 = vmatpush1.bf16.msra.mxu0 0
        %1688 = vmatprep.subr.bf16.mxu0 0
        %1689 = vmatpush1.bf16.msra.mxu0 0
        %1690 = vmatprep.mubr.bf16.mxu0 0
        %1691 = vmatmul.mubr.bf16.gmra.mrb[0].mxu0 %v1579
        %v1692 = vpop.f32.mrb[0].mxu0
        %v1693 = vadd.f32 %v1608, %v1692
        %v1694 = vpop.f32.mrb[0].mxu0
        %v1695 = vpop.f32.mrb[0].mxu0
        %v1696 = vadd.f32 %v1608, %v1695
        %v1697 = vpop.f32.mrb[0].mxu0
        %1698 = vmatprep.mubr.bf16.mxu0 0
        %1699 = vmatmul.mubr.bf16.gmra.mrb[0].mxu0 %v1580
        %v1700 = vpop.f32.mrb[0].mxu0
        %v1701 = vadd.f32 %v1608, %v1700
        %v1702 = vpop.f32.mrb[0].mxu0
        %v1703 = vpop.f32.mrb[0].mxu0
        %v1704 = vadd.f32 %v1608, %v1703
        %v1705 = vpop.f32.mrb[0].mxu0
        %1706 = vmatprep.mubr.bf16.mxu0 0
        %1707 = vmatmul.mubr.bf16.gmra.mrb[0].mxu0 %v1581
        %v1708 = vpop.f32.mrb[0].mxu0
        %v1709 = vadd.f32 %v1608, %v1708
        %v1710 = vpop.f32.mrb[0].mxu0
        %v1711 = vpop.f32.mrb[0].mxu0
        %v1712 = vadd.f32 %v1608, %v1711
        %v1713 = vpop.f32.mrb[0].mxu0
        %1714 = vmatprep.mubr.bf16.mxu0 0
        %1715 = vmatmul.mubr.bf16.gmra.mrb[0].mxu0 %v1582
        %v1716 = vpop.f32.mrb[0].mxu0
        %v1717 = vadd.f32 %v1608, %v1716
        %v1718 = vpop.f32.mrb[0].mxu0
        %v1719 = vpop.f32.mrb[0].mxu0
        %v1720 = vadd.f32 %v1608, %v1719
        %v1721 = vpop.f32.mrb[0].mxu0
        %1722 = vmatprep.mubr.bf16.mxu0 0
        %1723 = vmatmul.mubr.bf16.gmra.mrb[0].mxu0 %v1583
        %v1724 = vpop.f32.mrb[0].mxu0
        %v1725 = vadd.f32 %v1608, %v1724
        %v1726 = vpop.f32.mrb[0].mxu0
        %v1727 = vpop.f32.mrb[0].mxu0
        %v1728 = vadd.f32 %v1608, %v1727
        %v1729 = vpop.f32.mrb[0].mxu0
        %1730 = vmatprep.mubr.bf16.mxu0 0
        %1731 = vmatmul.mubr.bf16.gmra.mrb[0].mxu0 %v1584
        %v1732 = vpop.f32.mrb[0].mxu0
        %v1733 = vadd.f32 %v1608, %v1732
        %v1734 = vpop.f32.mrb[0].mxu0
        %v1735 = vpop.f32.mrb[0].mxu0
        %v1736 = vadd.f32 %v1608, %v1735
        %v1737 = vpop.f32.mrb[0].mxu0
        %1738 = vmatprep.mubr.bf16.mxu0 0
        %1739 = vmatmul.mubr.bf16.gmra.mrb[0].mxu0 %v1585
        %v1740 = vpop.f32.mrb[0].mxu0
        %v1741 = vadd.f32 %v1608, %v1740
        %v1742 = vpop.f32.mrb[0].mxu0
        %v1743 = vpop.f32.mrb[0].mxu0
        %v1744 = vadd.f32 %v1608, %v1743
        %v1745 = vpop.f32.mrb[0].mxu0
        %1746 = vmatprep.mubr.bf16.mxu0 0
        %1747 = vmatmul.mubr.bf16.gmra.mrb[0].mxu0 %v1586
        %v1748 = vpop.f32.mrb[0].mxu0
        %v1749 = vadd.f32 %v1608, %v1748
        %v1750 = vpop.f32.mrb[0].mxu0
        %v1751 = vpop.f32.mrb[0].mxu0
        %v1752 = vadd.f32 %v1608, %v1751
        %v1753 = vpop.f32.mrb[0].mxu0
        %1754 = vdwg.mxu0
        %v1755 = vmax.f32 %v1693, 0.0
        %v1756 = vmax.f32 %v1696, 0.0
        %v1757 = vmax.f32 %v1701, 0.0
        %v1758 = vmax.f32 %v1704, 0.0
        %v1759 = vmax.f32 %v1709, 0.0
        %v1760 = vmax.f32 %v1712, 0.0
        %v1761 = vmax.f32 %v1717, 0.0
        %v1762 = vmax.f32 %v1720, 0.0
        %v1763 = vmax.f32 %v1725, 0.0
        %v1764 = vmax.f32 %v1728, 0.0
        %v1765 = vmax.f32 %v1733, 0.0
        %v1766 = vmax.f32 %v1736, 0.0
        %v1767 = vmax.f32 %v1741, 0.0
        %v1768 = vmax.f32 %v1744, 0.0
        %v1769 = vmax.f32 %v1749, 0.0
        %v1770 = vmax.f32 %v1752, 0.0
        %v1771 = vmin.f32 %v1755, 6.0
        %v1772 = vmin.f32 %v1756, 6.0
        %v1773 = vmin.f32 %v1757, 6.0
        %v1774 = vmin.f32 %v1758, 6.0
        %v1775 = vmin.f32 %v1759, 6.0
        %v1776 = vmin.f32 %v1760, 6.0
        %v1777 = vmin.f32 %v1761, 6.0
        %v1778 = vmin.f32 %v1762, 6.0
        %v1779 = vmin.f32 %v1763, 6.0
        %v1780 = vmin.f32 %v1764, 6.0
        %v1781 = vmin.f32 %v1765, 6.0
        %v1782 = vmin.f32 %v1766, 6.0
        %v1783 = vmin.f32 %v1767, 6.0
        %v1784 = vmin.f32 %v1768, 6.0
        %v1785 = vmin.f32 %v1769, 6.0
        %v1786 = vmin.f32 %v1770, 6.0
        %v1787 = vpack.c.bf16 %v1772, %v1771
        %v1788 = vpack.c.bf16 %v1774, %v1773
        %v1789 = vpack.c.bf16 %v1776, %v1775
        %v1790 = vpack.c.bf16 %v1778, %v1777
        %v1791 = vpack.c.bf16 %v1780, %v1779
        %v1792 = vpack.c.bf16 %v1782, %v1781
        %v1793 = vpack.c.bf16 %v1784, %v1783
        %v1794 = vpack.c.bf16 %v1786, %v1785
        %v1795 = vld [vmem:[#allocation10] sm:$0xf]
        %v1796 = vld [vmem:[#allocation10 + $0x4] sm:$0xf]
        %v1797 = vld [vmem:[#allocation10 + $0x8] sm:$0xf]
        %v1798 = vld [vmem:[#allocation10 + $0xc] sm:$0xf]
        %v1799 = vld [vmem:[#allocation10 + $0x10] sm:$0xf]
        %v1800 = vld [vmem:[#allocation10 + $0x14] sm:$0xf]
        %v1801 = vld [vmem:[#allocation10 + $0x18] sm:$0xf]
        %v1802 = vld [vmem:[#allocation10 + $0x1c] sm:$0xf]
        %v1803 = vld [vmem:[#allocation10 + $0x20] sm:$0xf]
        %v1804 = vld [vmem:[#allocation10 + $0x24] sm:$0xf]
        %v1805 = vld [vmem:[#allocation10 + $0x28] sm:$0xf]
        %v1806 = vld [vmem:[#allocation10 + $0x2c] sm:$0xf]
        %v1807 = vld [vmem:[#allocation10 + $0x30] sm:$0xf]
        %v1808 = vld [vmem:[#allocation10 + $0x34] sm:$0xf]
        %v1809 = vld [vmem:[#allocation10 + $0x38] sm:$0xf]
        %v1810 = vld [vmem:[#allocation10 + $0x3c] sm:$0xf]
        %v1811 = vld [vmem:[%s6] sm:$0x1]
        %v1813 = vlaneseq
        %v1814 = vshrl.u32 %v1813, 7
        %v1815 = vsub.s32 0, %v1814
        %v1816 = vrot.slane %v1811, %v1815
        %v1834 = vunpack.c.l.b16 %v1795
        %v1835 = vunpack.c.l.b16 %v1796
        %v1836 = vunpack.c.l.b16 %v1797
        %v1837 = vunpack.c.l.b16 %v1798
        %v1838 = vunpack.c.l.b16 %v1799
        %v1839 = vunpack.c.l.b16 %v1800
        %v1840 = vunpack.c.l.b16 %v1801
        %v1841 = vunpack.c.l.b16 %v1802
        %v1842 = vunpack.c.l.b16 %v1803
        %v1843 = vunpack.c.l.b16 %v1804
        %v1844 = vunpack.c.l.b16 %v1805
        %v1845 = vunpack.c.l.b16 %v1806
        %v1846 = vunpack.c.l.b16 %v1807
        %v1847 = vunpack.c.l.b16 %v1808
        %v1848 = vunpack.c.l.b16 %v1809
        %v1849 = vunpack.c.l.b16 %v1810
        %v1850 = vpack.c.b16 %v1835, %v1834
        %v1851 = vpack.c.b16 %v1837, %v1836
        %v1852 = vpack.c.b16 %v1839, %v1838
        %v1853 = vpack.c.b16 %v1841, %v1840
        %v1854 = vpack.c.b16 %v1843, %v1842
        %v1855 = vpack.c.b16 %v1845, %v1844
        %v1856 = vpack.c.b16 %v1847, %v1846
        %v1857 = vpack.c.b16 %v1849, %v1848
        %1866 = vmatprep.subr.bf16.mxu0 0
        %1867 = vmatpush1.bf16.msra.mxu0 %v1850
        %1868 = vmatprep.subr.bf16.mxu0 0
        %1869 = vmatpush1.bf16.msra.mxu0 %v1851
        %1870 = vmatprep.subr.bf16.mxu0 0
        %1871 = vmatpush1.bf16.msra.mxu0 %v1852
        %1872 = vmatprep.subr.bf16.mxu0 0
        %1873 = vmatpush1.bf16.msra.mxu0 %v1853
        %1874 = vmatprep.subr.bf16.mxu0 0
        %1875 = vmatpush1.bf16.msra.mxu0 %v1854
        %1876 = vmatprep.subr.bf16.mxu0 0
        %1877 = vmatpush1.bf16.msra.mxu0 %v1855
        %1878 = vmatprep.subr.bf16.mxu0 0
        %1879 = vmatpush1.bf16.msra.mxu0 %v1856
        %1880 = vmatprep.subr.bf16.mxu0 0
        %1881 = vmatpush1.bf16.msra.mxu0 %v1857
        %1882 = vmatprep.subr.bf16.mxu0 0
        %1883 = vmatpush1.bf16.msra.mxu0 0
        %1884 = vmatprep.subr.bf16.mxu0 0
        %1885 = vmatpush1.bf16.msra.mxu0 0
        %1886 = vmatprep.subr.bf16.mxu0 0
        %1887 = vmatpush1.bf16.msra.mxu0 0
        %1888 = vmatprep.subr.bf16.mxu0 0
        %1889 = vmatpush1.bf16.msra.mxu0 0
        %1890 = vmatprep.subr.bf16.mxu0 0
        %1891 = vmatpush1.bf16.msra.mxu0 0
        %1892 = vmatprep.subr.bf16.mxu0 0
        %1893 = vmatpush1.bf16.msra.mxu0 0
        %1894 = vmatprep.subr.bf16.mxu0 0
        %1895 = vmatpush1.bf16.msra.mxu0 0
        %1896 = vmatprep.subr.bf16.mxu0 0
        %1897 = vmatpush1.bf16.msra.mxu0 0
        %1898 = vmatprep.mubr.bf16.mxu0 0
        %1899 = vmatmul.mubr.bf16.gmra.mrb[0].mxu0 %v1787
        %v1900 = vpop.f32.mrb[0].mxu0
        %v1901 = vadd.f32 %v1816, %v1900
        %v1902 = vpop.f32.mrb[0].mxu0
        %v1903 = vpop.f32.mrb[0].mxu0
        %v1904 = vadd.f32 %v1816, %v1903
        %v1905 = vpop.f32.mrb[0].mxu0
        %1906 = vmatprep.mubr.bf16.mxu0 0
        %1907 = vmatmul.mubr.bf16.gmra.mrb[0].mxu0 %v1788
        %v1908 = vpop.f32.mrb[0].mxu0
        %v1909 = vadd.f32 %v1816, %v1908
        %v1910 = vpop.f32.mrb[0].mxu0
        %v1911 = vpop.f32.mrb[0].mxu0
        %v1912 = vadd.f32 %v1816, %v1911
        %v1913 = vpop.f32.mrb[0].mxu0
        %1914 = vmatprep.mubr.bf16.mxu0 0
        %1915 = vmatmul.mubr.bf16.gmra.mrb[0].mxu0 %v1789
        %v1916 = vpop.f32.mrb[0].mxu0
        %v1917 = vadd.f32 %v1816, %v1916
        %v1918 = vpop.f32.mrb[0].mxu0
        %v1919 = vpop.f32.mrb[0].mxu0
        %v1920 = vadd.f32 %v1816, %v1919
        %v1921 = vpop.f32.mrb[0].mxu0
        %1922 = vmatprep.mubr.bf16.mxu0 0
        %1923 = vmatmul.mubr.bf16.gmra.mrb[0].mxu0 %v1790
        %v1924 = vpop.f32.mrb[0].mxu0
        %v1925 = vadd.f32 %v1816, %v1924
        %v1926 = vpop.f32.mrb[0].mxu0
        %v1927 = vpop.f32.mrb[0].mxu0
        %v1928 = vadd.f32 %v1816, %v1927
        %v1929 = vpop.f32.mrb[0].mxu0
        %1930 = vmatprep.mubr.bf16.mxu0 0
        %1931 = vmatmul.mubr.bf16.gmra.mrb[0].mxu0 %v1791
        %v1932 = vpop.f32.mrb[0].mxu0
        %v1933 = vadd.f32 %v1816, %v1932
        %v1934 = vpop.f32.mrb[0].mxu0
        %v1935 = vpop.f32.mrb[0].mxu0
        %v1936 = vadd.f32 %v1816, %v1935
        %v1937 = vpop.f32.mrb[0].mxu0
        %1938 = vmatprep.mubr.bf16.mxu0 0
        %1939 = vmatmul.mubr.bf16.gmra.mrb[0].mxu0 %v1792
        %v1940 = vpop.f32.mrb[0].mxu0
        %v1941 = vadd.f32 %v1816, %v1940
        %v1942 = vpop.f32.mrb[0].mxu0
        %v1943 = vpop.f32.mrb[0].mxu0
        %v1944 = vadd.f32 %v1816, %v1943
        %v1945 = vpop.f32.mrb[0].mxu0
        %1946 = vmatprep.mubr.bf16.mxu0 0
        %1947 = vmatmul.mubr.bf16.gmra.mrb[0].mxu0 %v1793
        %v1948 = vpop.f32.mrb[0].mxu0
        %v1949 = vadd.f32 %v1816, %v1948
        %v1950 = vpop.f32.mrb[0].mxu0
        %v1951 = vpop.f32.mrb[0].mxu0
        %v1952 = vadd.f32 %v1816, %v1951
        %v1953 = vpop.f32.mrb[0].mxu0
        %1954 = vmatprep.mubr.bf16.mxu0 0
        %1955 = vmatmul.mubr.bf16.gmra.mrb[0].mxu0 %v1794
        %v1956 = vpop.f32.mrb[0].mxu0
        %v1957 = vadd.f32 %v1816, %v1956
        %v1958 = vpop.f32.mrb[0].mxu0
        %v1959 = vpop.f32.mrb[0].mxu0
        %v1960 = vadd.f32 %v1816, %v1959
        %v1961 = vpop.f32.mrb[0].mxu0
        %1962 = vdwg.mxu0
        %v1963 = vadd.f32 %v1901, %v377
        %v1964 = vadd.f32 %v1904, %v378
        %v1965 = vadd.f32 %v1909, %v379
        %v1966 = vadd.f32 %v1912, %v380
        %v1967 = vadd.f32 %v1917, %v381
        %v1968 = vadd.f32 %v1920, %v382
        %v1969 = vadd.f32 %v1925, %v383
        %v1970 = vadd.f32 %v1928, %v384
        %v1971 = vadd.f32 %v1933, %v385
        %v1972 = vadd.f32 %v1936, %v386
        %v1973 = vadd.f32 %v1941, %v387
        %v1974 = vadd.f32 %v1944, %v388
        %v1975 = vadd.f32 %v1949, %v389
        %v1976 = vadd.f32 %v1952, %v390
        %v1977 = vadd.f32 %v1957, %v391
        %v1978 = vadd.f32 %v1960, %v392
        %1979 = vst [vmem:[%s372] sm:$0xff] %v1963
        %1980 = vst [vmem:[%s372 + $0x8] sm:$0xff] %v1964
        %1981 = vst [vmem:[%s372 + $0x10] sm:$0xff] %v1965
        %1982 = vst [vmem:[%s372 + $0x18] sm:$0xff] %v1966
        %1983 = vst [vmem:[%s372 + $0x20] sm:$0xff] %v1967
        %1984 = vst [vmem:[%s372 + $0x28] sm:$0xff] %v1968
        %1985 = vst [vmem:[%s372 + $0x30] sm:$0xff] %v1969
        %1986 = vst [vmem:[%s372 + $0x38] sm:$0xff] %v1970
        %1987 = vst [vmem:[%s372 + $0x40] sm:$0xff] %v1971
        %1988 = vst [vmem:[%s372 + $0x48] sm:$0xff] %v1972
        %1989 = vst [vmem:[%s372 + $0x50] sm:$0xff] %v1973
        %1990 = vst [vmem:[%s372 + $0x58] sm:$0xff] %v1974
        %1991 = vst [vmem:[%s372 + $0x60] sm:$0xff] %v1975
        %1992 = vst [vmem:[%s372 + $0x68] sm:$0xff] %v1976
        %1993 = vst [vmem:[%s372 + $0x70] sm:$0xff] %v1977
        %1994 = vst [vmem:[%s372 + $0x78] sm:$0xff] %v1978
        %s1995 = sand.u32 %s202, 1
        %s1996 = scalar_lea.sflag [#allocation4], %s1995
        %s1997 = sand.u32 %s202, 1
        %s1998 = smul.addr %s1997, 128
        %s1999 = scalar_lea.vmem [#allocation11], %s1998
        // Predicated region
        $region69: #{tpu_custom_call.1} parent=47 // pred_check
          %p2000 = pneg %p212
        $region70: #{tpu_custom_call.1} parent=47 // pred_check_branch
          %2002 = sbr.rel (%p2000) target = $region72
        $region71: #{tpu_custom_call.1} parent=47 // pred_region
          %s2003 = smul.u32 8, %s31
          %s2005 = ssub.s32 2048, 2048
          %2006 = vsyncadd %s1996, %s2005
          %s2007 = smul.addr %s2003, 2
          %s2008 = smul.addr %s30, 32
          %s2009 = sadd.s32 %s2007, %s2008
          %s2010 = smul.addr %s2009, 128
          %s2011 = scalar_lea.hbm %s7, %s2010
          %s2012 = sshll.u32 %s1999, 4
          %s2013 = int_to_ptr.vmem [resolvable:$true] %s2012
          %2018 = dma.vmem_to_hbm [thread:$0]  %s2013, 2048, %s2011, %s1996, 128, 128, 8
        $region72: #{tpu_custom_call.1} parent=47 // pred_fallthru
          _
      $region48: #{tpu_custom_call.1} parent=5 // pred_fallthru
        _
      %p2019 = scmp.le.s32.totalorder 2, %s21
      // Predicated region
      $region73: #{tpu_custom_call.1} parent=5 // pred_check
        %p2020 = pneg %p2019
      $region74: #{tpu_custom_call.1} parent=5 // pred_check_branch
        %2022 = sbr.rel (%p2020) target = $region76
      $region75: #{tpu_custom_call.1} parent=5 // pred_region
        %s2023 = ssub.s32 %s21, 2
        // Predicated region
        $region77: #{tpu_custom_call.1} parent=75 // pred_check
          %p2024 = pneg %p218
        $region78: #{tpu_custom_call.1} parent=75 // pred_check_branch
          %2026 = sbr.rel (%p2024) target = $region80
        $region79: #{tpu_custom_call.1} parent=75 // pred_region
          %s2027 = sand.u32 %s203, 1
          %s2028 = scalar_lea.sflag [#allocation4], %s2027
          %s2029 = sand.u32 %s203, 1
          %s2030 = smul.addr %s2029, 128
          %s2031 = scalar_lea.vmem [#allocation11], %s2030
          %2032 = dma.done %s2028, 2048
        $region80: #{tpu_custom_call.1} parent=75 // pred_fallthru
          _
      $region76: #{tpu_custom_call.1} parent=5 // pred_fallthru
        _
    $region6: #{tpu_custom_call.1} parent=1 // loop_footer
      %s25 = sadd.s32 1, %s21
    $region7: #{tpu_custom_call.1} parent=1 // loop_footer_branch
      %20 = sbr.rel target = $region3
    $region8: #{tpu_custom_call.1} parent=1 // loop_exit
      _
    %2033 = vsyncpa [#allocation3], 1
    %s2034 = scalar_lea.sflag [#allocation3], 1
    %2035 = vsyncpa %s2034, 1
    %2036 = vsyncpa [#allocation6], 1
    %2037 = vsyncpa [#allocation9], 1
    %2038 = vsyncpa [#allocation4], 1
    %s2039 = scalar_lea.sflag [#allocation4], 1
    %2040 = vsyncpa %s2039, 1

</llo_original>
